<compile_context>
chip_gen: v7x
topology: tpu7x:2x2x1
jax: 0.10.0
libtpu: 0.0.40
codegen_flags: <defaults>
</compile_context>

<pallas_src>
import math

import jax
import jax.numpy as jnp
from jax.experimental import pallas as pl
from jax.experimental.pallas import tpu as pltpu

_LN_EPS = 1e-5  # torch.nn.LayerNorm default


# ---------------------------------------------------------------------------
# Small helpers
# ---------------------------------------------------------------------------
def _vmem_limit_bytes():
    """Per-generation VMEM budget: ~48 MiB on v7x (64 MiB phys), ~96 MiB on v5e/v6e."""
    cap = 64 * 1024 * 1024
    try:
        info = pltpu.get_tpu_info()
        cap = int(getattr(info, "vmem_capacity_bytes", cap) or cap)
    except Exception:
        pass
    return int(min(cap * 3 // 4, 100 * 1024 * 1024))


def _pick_tile(dim, candidates, min_steps=1):
    """Largest candidate dividing dim with >= min_steps grid steps (with fallbacks)."""
    for c in candidates:
        if c <= dim and dim % c == 0 and dim // c >= min_steps:
            return c
    for c in candidates:
        if c <= dim and dim % c == 0:
            return c
    return dim


def _gelu_tanh(x):
    # Matches torch.nn.GELU(approximate='tanh')
    c = math.sqrt(2.0 / math.pi)
    return 0.5 * x * (1.0 + jnp.tanh(c * (x + 0.044715 * x * x * x)))


def _ln_rows_f32(x_f32, g_f32, b_f32):
    mu = jnp.mean(x_f32, axis=-1, keepdims=True)
    var = jnp.mean(jnp.square(x_f32 - mu), axis=-1, keepdims=True)
    return (x_f32 - mu) * jax.lax.rsqrt(var + _LN_EPS) * g_f32 + b_f32


# ---------------------------------------------------------------------------
# Kernel 1: out[i, j] = LayerNorm(x[i]) @ W[:, j] + b[j]        (LN1 + c_attn)
# grid = (M//tm, N//tn); LN(x) is computed once per row tile (at j == 0) into
# a VMEM scratch (in the matmul compute dtype) and reused for every column
# tile.  When the whole weight fits VMEM, tn = N so it is DMA'd once.
# ---------------------------------------------------------------------------
def _ln_matmul_kernel(x_ref, g_ref, b_ref, w_ref, bias_ref, o_ref, xln_ref):
    @pl.when(pl.program_id(1) == 0)
    def _():
        x = x_ref[...].astype(jnp.float32)
        xln = _ln_rows_f32(x, g_ref[...], b_ref[...])
        xln_ref[...] = xln.astype(xln_ref.dtype)

    acc = jnp.dot(xln_ref[...], w_ref[...], preferred_element_type=jnp.float32)
    o_ref[...] = (acc + bias_ref[...]).astype(o_ref.dtype)


def ln_matmul_bias(x2d, gamma, beta, w_t, b, out_dtype):
    """out = LayerNorm(x2d) @ w_t + b.   x2d: (M, C); w_t: (C, N); b: (N,)."""
    M, C = x2d.shape
    N = w_t.shape[1]
    limit = _vmem_limit_bytes()
    budget = int(limit * 0.8)
    xs = x2d.dtype.itemsize
    ws = w_t.dtype.itemsize
    os_ = jnp.dtype(out_dtype).itemsize

    tm = _pick_tile(M, (512, 256, 128), min_steps=2)

    def est(tm_, tn_):
        return (2 * tm_ * C * xs          # x row tiles (double buffered)
                + 2 * C * tn_ * ws        # weight tile
                + 2 * tm_ * tn_ * os_     # output tile
                + tm_ * C * (ws + 4)      # LN scratch + f32 temp
                + tm_ * tn_ * 4           # f32 matmul result before cast
                + 16 * C * 4 + 8 * tn_ * 4)

    tn = N                                # prefer a fully VMEM-resident weight
    if est(tm, tn) > budget:
        for cand in (2304, 1536, 1152, 1024, 768, 512, 384, 256, 128):
            if cand <= N and N % cand == 0 and est(tm, cand) <= budget:
                tn = cand
                break

    return pl.pallas_call(
        _ln_matmul_kernel,
        out_shape=jax.ShapeDtypeStruct((M, N), out_dtype),
        grid_spec=pltpu.PrefetchScalarGridSpec(
            num_scalar_prefetch=0,
            grid=(M // tm, N // tn),
            in_specs=[
                pl.BlockSpec((tm, C), lambda i, j: (i, 0)),   # x row tile
                pl.BlockSpec((1, C), lambda i, j: (0, 0)),    # ln gamma
                pl.BlockSpec((1, C), lambda i, j: (0, 0)),    # ln beta
                pl.BlockSpec((C, tn), lambda i, j: (0, j)),   # weight col tile
                pl.BlockSpec((1, tn), lambda i, j: (0, j)),   # bias col tile
            ],
            out_specs=pl.BlockSpec((tm, tn), lambda i, j: (i, j)),
            scratch_shapes=[pltpu.VMEM((tm, C), w_t.dtype)],  # cached LN(x)
        ),
        compiler_params=pltpu.CompilerParams(
            dimension_semantics=("parallel", "arbitrary"),
            vmem_limit_bytes=limit),
    )(x2d,
      gamma.reshape(1, C).astype(jnp.float32),
      beta.reshape(1, C).astype(jnp.float32),
      w_t,
      b.reshape(1, N).astype(jnp.float32))


# ---------------------------------------------------------------------------
# Kernel 2: causal self-attention straight out of the (B, T, 3C) qkv tensor.
# grid = (B, n_head // G); each step handles G heads so the output slab is
# (T, G*hd >= 128 lanes) and lands directly in (B, T, C) order.
# ---------------------------------------------------------------------------
def _make_attn_kernel(head_dim, n_heads, q_off, k_off, v_off):
    def kernel(q_ref, k_ref, v_ref, o_ref):
        t = q_ref.shape[0]
        scale = 1.0 / math.sqrt(head_dim)
        row = jax.lax.broadcasted_iota(jnp.int32, (t, 1), 0)
        col = jax.lax.broadcasted_iota(jnp.int32, (1, t), 1)
        causal = col <= row                       # (t, t) via broadcast
        neg = jnp.float32(-1e30)
        outs = []
        for h in range(n_heads):
            lo = h * head_dim
            q = q_ref[:, q_off + lo:q_off + lo + head_dim]
            k = k_ref[:, k_off + lo:k_off + lo + head_dim]
            v = v_ref[:, v_off + lo:v_off + lo + head_dim]
            q = q * jnp.asarray(scale, dtype=q.dtype)
            s = jax.lax.dot_general(q, k, (((1,), (1,)), ((), ())),
                                    preferred_element_type=jnp.float32)
            s = jnp.where(causal, s, neg)
            m = jnp.max(s, axis=-1, keepdims=True)
            p = jnp.exp(s - m)
            l = jnp.sum(p, axis=-1, keepdims=True)
            o = jax.lax.dot_general(p.astype(v.dtype), v,
                                    (((1,), (0,)), ((), ())),
                                    preferred_element_type=jnp.float32)
            outs.append(o * pl.reciprocal(l, approx=True))
        out = outs[0] if len(outs) == 1 else jnp.concatenate(outs, axis=-1)
        o_ref[...] = out.astype(o_ref.dtype)
    return kernel


def _pick_head_group(n_head, head_dim):
    # smallest divisor G of n_head with G*head_dim a multiple of 128 lanes
    for g in range(1, n_head + 1):
        if n_head % g == 0 and (g * head_dim) % 128 == 0:
            return g
    return n_head


def causal_attention(qkv3d, n_head, head_dim, out_dtype):
    """qkv3d: (B, T, 3C) with columns ordered [q | k | v]; returns (B, T, C)."""
    B, T, three_c = qkv3d.shape
    C = n_head * head_dim
    assert three_c == 3 * C
    limit = _vmem_limit_bytes()

    G = _pick_head_group(n_head, head_dim)
    W = G * head_dim
    n_groups = n_head // G

    if W % 128 == 0:
        kernel = _make_attn_kernel(head_dim, G, 0, 0, 0)
        blk = (None, T, W)
        q_spec = pl.BlockSpec(blk, lambda b, g: (b, 0, g))
        k_spec = pl.BlockSpec(blk, lambda b, g, ng=n_groups: (b, 0, ng + g))
        v_spec = pl.BlockSpec(blk, lambda b, g, ng=n_groups: (b, 0, 2 * ng + g))
        out_spec = pl.BlockSpec(blk, lambda b, g: (b, 0, g))
        grid = (B, n_groups)
    else:
        # Odd tiny head configs: fall back to full-width (always layout-legal)
        # blocks; q/k/v are sliced inside the kernel at offsets 0 / C / 2C.
        kernel = _make_attn_kernel(head_dim, n_head, 0, C, 2 * C)
        full = pl.BlockSpec((None, T, three_c), lambda b, g: (b, 0, 0))
        q_spec = k_spec = v_spec = full
        out_spec = pl.BlockSpec((None, T, C), lambda b, g: (b, 0, 0))
        grid = (B, 1)

    # Note: full-T per head group is fine for GPT-2-scale context (T <= ~1k);
    # flash-style q/kv tiling would be needed for much longer sequences.
    return pl.pallas_call(
        kernel,
        out_shape=jax.ShapeDtypeStruct((B, T, C), out_dtype),
        grid_spec=pltpu.PrefetchScalarGridSpec(
            num_scalar_prefetch=0,
            grid=grid,
            in_specs=[q_spec, k_spec, v_spec],
            out_specs=out_spec),
        compiler_params=pltpu.CompilerParams(
            dimension_semantics=("parallel", "parallel"),
            vmem_limit_bytes=limit),
    )(qkv3d, qkv3d, qkv3d)


# ---------------------------------------------------------------------------
# Kernel 3 (fused): attention c_proj + residual + LN2 + MLP + residual.
#   xres = x + y @ Wproj + bproj
#   out  = xres + GELU(LN2(xres) @ W1 + b1) @ W2 + b2
# grid = (M//tm, H//th).  The c_proj/LN2 prologue runs at h == 0; the MLP
# second matmul accumulates h-chunks into an f32 scratch; b2 + residual are
# applied on the final h step only.
# ---------------------------------------------------------------------------
def _proj_ln_mlp_kernel(y_ref, wp_ref, bp_ref, x_ref, g_ref, b_ref,
                        w1_ref, b1_ref, w2_ref, b2_ref, o_ref,
                        xres_ref, xln_ref, acc_ref):
    h_idx = pl.program_id(1)

    @pl.when(h_idx == 0)
    def _():
        proj = jnp.dot(y_ref[...], wp_ref[...],
                       preferred_element_type=jnp.float32)
        xres = proj + bp_ref[...] + x_ref[...].astype(jnp.float32)
        xres_ref[...] = xres
        xln_ref[...] = _ln_rows_f32(xres, g_ref[...], b_ref[...]).astype(
            xln_ref.dtype)
        acc_ref[...] = jnp.zeros_like(acc_ref)

    h = jnp.dot(xln_ref[...], w1_ref[...], preferred_element_type=jnp.float32)
    h = _gelu_tanh(h + b1_ref[...])
    acc_ref[...] += jnp.dot(h.astype(w2_ref.dtype), w2_ref[...],
                            preferred_element_type=jnp.float32)

    @pl.when(h_idx == pl.num_programs(1) - 1)
    def _():
        o_ref[...] = (acc_ref[...] + b2_ref[...] + xres_ref[...]).astype(
            o_ref.dtype)


def attn_proj_ln2_mlp_residual(y2d, wp_t, bp, x2d, gamma, beta,
                               w1_t, b1, w2_t, b2, out_dtype):
    M, C = x2d.shape
    H = w1_t.shape[1]
    limit = _vmem_limit_bytes()
    budget = int(limit * 0.8)
    cs = w1_t.dtype.itemsize
    xs = x2d.dtype.itemsize
    ys = y2d.dtype.itemsize
    os_ = jnp.dtype(out_dtype).itemsize

    tm = _pick_tile(M, (512, 256, 128), min_steps=2)

    def est(tm_, th_):
        return (2 * tm_ * C * ys           # attn-out tiles
                + 2 * C * C * cs           # attn c_proj weight (resident)
                + 2 * tm_ * C * xs         # residual tiles
                + 2 * C * th_ * cs         # c_fc weight chunk
                + 2 * th_ * C * cs         # mlp c_proj weight chunk
                + 2 * tm_ * C * os_        # output tiles
                + tm_ * C * (4 + cs + 4)   # xres / xln / acc scratches
                + 2 * tm_ * th_ * 4        # GELU / dot f32 temporaries
                + 16 * (C + th_) * 4)

    th = H                                 # prefer fully resident MLP weights
    if est(tm, th) > budget:
        chosen = None
        for tm_c in (tm, 256, 128):
            if tm_c > M or M % tm_c != 0:
                continue
            for cand in (4096, 3072, 2048, 1536, 1024, 768, 512, 384, 256, 128):
                if cand <= H and H % cand == 0 and est(tm_c, cand) <= budget:
                    chosen = (tm_c, cand)
                    break
            if chosen:
                break
        if chosen:
            tm, th = chosen
        else:
            tm = _pick_tile(M, (128,), 1)
            th = _pick_tile(H, (256, 128), 1)

    return pl.pallas_call(
        _proj_ln_mlp_kernel,
        out_shape=jax.ShapeDtypeStruct((M, C), out_dtype),
        grid_spec=pltpu.PrefetchScalarGridSpec(
            num_scalar_prefetch=0,
            grid=(M // tm, H // th),
            in_specs=[
                pl.BlockSpec((tm, C), lambda i, h: (i, 0)),   # attn out y
                pl.BlockSpec((C, C), lambda i, h: (0, 0)),    # attn c_proj W
                pl.BlockSpec((1, C), lambda i, h: (0, 0)),    # attn c_proj b
                pl.BlockSpec((tm, C), lambda i, h: (i, 0)),   # residual x
                pl.BlockSpec((1, C), lambda i, h: (0, 0)),    # ln2 gamma
                pl.BlockSpec((1, C), lambda i, h: (0, 0)),    # ln2 beta
                pl.BlockSpec((C, th), lambda i, h: (0, h)),   # c_fc W chunk
                pl.BlockSpec((1, th), lambda i, h: (0, h)),   # c_fc b chunk
                pl.BlockSpec((th, C), lambda i, h: (h, 0)),   # mlp c_proj W
                pl.BlockSpec((1, C), lambda i, h: (0, 0)),    # mlp c_proj b
            ],
            out_specs=pl.BlockSpec((tm, C), lambda i, h: (i, 0)),
            scratch_shapes=[
                pltpu.VMEM((tm, C), jnp.float32),   # xres = x + attn out
                pltpu.VMEM((tm, C), w1_t.dtype),    # LN2(xres) in compute dtype
                pltpu.VMEM((tm, C), jnp.float32),   # f32 MLP accumulator
            ],
        ),
        compiler_params=pltpu.CompilerParams(
            dimension_semantics=("parallel", "arbitrary"),
            vmem_limit_bytes=limit),
    )(y2d, wp_t, bp.reshape(1, C).astype(jnp.float32), x2d,
      gamma.reshape(1, C).astype(jnp.float32),
      beta.reshape(1, C).astype(jnp.float32),
      w1_t, b1.reshape(1, H).astype(jnp.float32),
      w2_t, b2.reshape(1, C).astype(jnp.float32))


# ---------------------------------------------------------------------------
# Full Block forward
# ---------------------------------------------------------------------------
def block_forward(x, params, compute_dtype=jnp.bfloat16):
    """x: (B, T, C).  Matches: x = x + attn(ln_1(x)); x = x + mlp(ln_2(x))."""
    B, T, C = x.shape
    n_head = params["n_head"]
    head_dim = C // n_head
    M = B * T
    cd = jnp.dtype(compute_dtype)

    x2d = x.reshape(M, C)

    # [1] qkv = LN1(x) @ Wqkv + bqkv   (fused LN + matmul, compute-dtype MXU feed)
    qkv = ln_matmul_bias(
        x2d, params["ln1_g"], params["ln1_b"],
        params["attn_w"].T.astype(cd), params["attn_b"], out_dtype=cd)

    # [2] causal attention reading qkv in (B, T, 3C) layout and writing the
    #     per-head outputs directly in (B, T, C) order (no XLA transposes).
    qkv3d = qkv.reshape(B, T, 3 * C)
    y = causal_attention(qkv3d, n_head, head_dim, out_dtype=cd)
    y2d = y.reshape(M, C)

    # [3] x = x + y @ Wproj + bproj ;  x = x + MLP(LN2(x))   (single fused kernel)
    out2d = attn_proj_ln2_mlp_residual(
        y2d, params["attn_proj_w"].T.astype(cd), params["attn_proj_b"],
        x2d, params["ln2_g"], params["ln2_b"],
        params["fc_w"].T.astype(cd), params["fc_b"],
        params["proj_w"].T.astype(cd), params["proj_b"],
        out_dtype=x.dtype)
    return out2d.reshape(B, T, C)


# ---------------------------------------------------------------------------
# Pure-JAX reference (high precision) matching the torch Block semantics
# ---------------------------------------------------------------------------
def block_reference(x, params):
    hp = jax.lax.Precision.HIGHEST
    B, T, C = x.shape
    nH = params["n_head"]
    hd = C // nH

    def ln(u, g, b):
        mu = u.mean(-1, keepdims=True)
        var = jnp.mean(jnp.square(u - mu), -1, keepdims=True)
        return (u - mu) * jax.lax.rsqrt(var + _LN_EPS) * g + b

    h = ln(x, params["ln1_g"], params["ln1_b"])
    qkv = jnp.einsum("btc,nc->btn", h, params["attn_w"], precision=hp) \
        + params["attn_b"]
    q, k, v = jnp.split(qkv, 3, axis=-1)

    def heads(u):
        return u.reshape(B, T, nH, hd).transpose(0, 2, 1, 3)

    q, k, v = heads(q), heads(k), heads(v)
    s = jnp.einsum("bhqd,bhkd->bhqk", q, k, precision=hp) / math.sqrt(hd)
    mask = jnp.tril(jnp.ones((T, T), dtype=bool))
    s = jnp.where(mask, s, -1e30)
    a = jax.nn.softmax(s, axis=-1)
    y = jnp.einsum("bhqk,bhkd->bhqd", a, v, precision=hp)
    y = y.transpose(0, 2, 1, 3).reshape(B, T, C)
    y = jnp.einsum("btc,oc->bto", y, params["attn_proj_w"], precision=hp) \
        + params["attn_proj_b"]
    x = x + y

    h2 = ln(x, params["ln2_g"], params["ln2_b"])
    m = jnp.einsum("btc,hc->bth", h2, params["fc_w"], precision=hp) \
        + params["fc_b"]
    m = _gelu_tanh(m)
    m = jnp.einsum("bth,ch->btc", m, params["proj_w"], precision=hp) \
        + params["proj_b"]
    return x + m


if __name__ == "__main__":
    # Small GPT-2-style config: n_embd=128, n_head=4, batch=2, seq=256
    B, T, C, n_head = 2, 256, 128, 4
    H = 4 * C

    key = jax.random.PRNGKey(0)
    ks = jax.random.split(key, 13)

    x = jax.random.normal(ks[0], (B, T, C), dtype=jnp.float32)
    params = dict(
        n_head=n_head,
        ln1_g=1.0 + 0.1 * jax.random.normal(ks[1], (C,), jnp.float32),
        ln1_b=0.1 * jax.random.normal(ks[2], (C,), jnp.float32),
        attn_w=jax.random.normal(ks[3], (3 * C, C), jnp.float32) / math.sqrt(C),
        attn_b=0.01 * jax.random.normal(ks[4], (3 * C,), jnp.float32),
        attn_proj_w=jax.random.normal(ks[5], (C, C), jnp.float32) / math.sqrt(C),
        attn_proj_b=0.01 * jax.random.normal(ks[6], (C,), jnp.float32),
        ln2_g=1.0 + 0.1 * jax.random.normal(ks[7], (C,), jnp.float32),
        ln2_b=0.1 * jax.random.normal(ks[8], (C,), jnp.float32),
        fc_w=jax.random.normal(ks[9], (H, C), jnp.float32) / math.sqrt(C),
        fc_b=0.01 * jax.random.normal(ks[10], (H,), jnp.float32),
        proj_w=jax.random.normal(ks[11], (C, H), jnp.float32) / math.sqrt(H),
        proj_b=0.01 * jax.random.normal(ks[12], (C,), jnp.float32),
    )

    ref = jax.block_until_ready(block_reference(x, params))

    out_f32 = jax.block_until_ready(
        block_forward(x, params, compute_dtype=jnp.float32))
    out_bf16 = jax.block_until_ready(
        block_forward(x, params, compute_dtype=jnp.bfloat16))

    def frob_rel(a, b):
        a = a.astype(jnp.float32)
        b = b.astype(jnp.float32)
        return float(jnp.linalg.norm(a - b) / (jnp.linalg.norm(b) + 1e-30))

    assert out_f32.shape == (B, T, C) and out_bf16.shape == (B, T, C)

    err32 = frob_rel(out_f32, ref)
    err16 = frob_rel(out_bf16, ref)
    assert err32 < 1.5e-2, f"f32-path relative error too large: {err32}"
    assert err16 < 2.5e-2, f"bf16-path relative error too large: {err16}"
    # localized-bug guards (generous elementwise bounds; real bugs are O(1) off)
    assert bool(jnp.allclose(out_f32, ref, atol=0.1, rtol=0.1)), \
        "f32 path elementwise mismatch"
    assert bool(jnp.allclose(out_bf16.astype(jnp.float32), ref,
                             atol=0.2, rtol=0.1)), \
        "bf16 path elementwise mismatch"

    print("KERNEL_OK")
</pallas_src>

<mosaic_0001>
module attributes {stable_mosaic.version = 11 : i64} {
  func.func @_ln_matmul_kernel(%arg0: i32, %arg1: i32, %arg2: memref<256x128xf32, #tpu.memory_space<vmem>>, %arg3: memref<1x128xf32, #tpu.memory_space<vmem>>, %arg4: memref<1x128xf32, #tpu.memory_space<vmem>>, %arg5: memref<128x384xf32, #tpu.memory_space<vmem>>, %arg6: memref<1x384xf32, #tpu.memory_space<vmem>>, %arg7: memref<256x384xf32, #tpu.memory_space<vmem>>, %arg8: memref<256x128xf32, #tpu.memory_space<vmem>>) attributes {dimension_semantics = [#tpu.dimension_semantics<parallel>, #tpu.dimension_semantics<arbitrary>], iteration_bounds = array<i64: 2, 1>, scalar_prefetch = 0 : i64, scratch_operands = 1 : i64, tpu.core_type = #tpu.core_type<tc>, window_params = [{transform_indices = @transform_0, window_bounds = array<i64: 256, 128>}, {pipeline_mode = #tpu.pipeline_mode<synchronous>, transform_indices = @transform_1, window_bounds = array<i64: 1, 128>}, {pipeline_mode = #tpu.pipeline_mode<synchronous>, transform_indices = @transform_2, window_bounds = array<i64: 1, 128>}, {transform_indices = @transform_3, window_bounds = array<i64: 128, 384>}, {transform_indices = @transform_4, window_bounds = array<i64: 1, 384>}, {transform_indices = @transform_5, window_bounds = array<i64: 256, 384>}]} {
    %c0_i32 = arith.constant 0 : i32
    %0 = arith.cmpi eq, %arg1, %c0_i32 : i32
    %1 = arith.extui %0 : i1 to i32
    %c0_i32_0 = arith.constant 0 : i32
    %2 = arith.cmpi ne, %1, %c0_i32_0 : i32
    scf.if %2 {
      %c0_8 = arith.constant 0 : index
      %c0_9 = arith.constant 0 : index
      %10 = vector.load %arg2[%c0_8, %c0_9] : memref<256x128xf32, #tpu.memory_space<vmem>>, vector<256x128xf32>
      %c0_10 = arith.constant 0 : index
      %c0_11 = arith.constant 0 : index
      %11 = vector.load %arg3[%c0_10, %c0_11] : memref<1x128xf32, #tpu.memory_space<vmem>>, vector<1x128xf32>
      %c0_12 = arith.constant 0 : index
      %c0_13 = arith.constant 0 : index
      %12 = vector.load %arg4[%c0_12, %c0_13] : memref<1x128xf32, #tpu.memory_space<vmem>>, vector<1x128xf32>
      %cst_14 = arith.constant dense<0.000000e+00> : vector<256xf32>
      %13 = vector.multi_reduction <add>, %10, %cst_14 [1] : vector<256x128xf32> to vector<256xf32>
      %14 = vector.shape_cast %13 : vector<256xf32> to vector<256x1xf32>
      %cst_15 = arith.constant 1.280000e+02 : f32
      %15 = vector.broadcast %cst_15 : f32 to vector<256x1xf32>
      %16 = arith.divf %14, %15 : vector<256x1xf32>
      %17 = vector.broadcast %16 : vector<256x1xf32> to vector<256x128xf32>
      %18 = arith.subf %10, %17 : vector<256x128xf32>
      %19 = arith.mulf %18, %18 : vector<256x128xf32>
      %cst_16 = arith.constant dense<0.000000e+00> : vector<256xf32>
      %20 = vector.multi_reduction <add>, %19, %cst_16 [1] : vector<256x128xf32> to vector<256xf32>
      %21 = vector.shape_cast %20 : vector<256xf32> to vector<256x1xf32>
      %cst_17 = arith.constant 1.280000e+02 : f32
      %22 = vector.broadcast %cst_17 : f32 to vector<256x1xf32>
      %23 = arith.divf %21, %22 : vector<256x1xf32>
      %24 = vector.broadcast %16 : vector<256x1xf32> to vector<256x128xf32>
      %25 = arith.subf %10, %24 : vector<256x128xf32>
      %cst_18 = arith.constant 9.99999974E-6 : f32
      %26 = vector.broadcast %cst_18 : f32 to vector<256x1xf32>
      %27 = arith.addf %23, %26 : vector<256x1xf32>
      %28 = math.rsqrt %27 : vector<256x1xf32>
      %29 = vector.broadcast %28 : vector<256x1xf32> to vector<256x128xf32>
      %30 = arith.mulf %25, %29 : vector<256x128xf32>
      %31 = vector.broadcast %11 : vector<1x128xf32> to vector<256x128xf32>
      %32 = arith.mulf %30, %31 : vector<256x128xf32>
      %33 = vector.broadcast %12 : vector<1x128xf32> to vector<256x128xf32>
      %34 = arith.addf %32, %33 : vector<256x128xf32>
      %c0_19 = arith.constant 0 : index
      %c0_20 = arith.constant 0 : index
      %35 = vector.load %arg8[%c0_19, %c0_20] : memref<256x128xf32, #tpu.memory_space<vmem>>, vector<256x128xf32>
      tpu.vector_store %arg8[%c0_19, %c0_20], %34 {strides = array<i32>} : memref<256x128xf32, #tpu.memory_space<vmem>>, vector<256x128xf32>,
    } else {
    }
    %c0 = arith.constant 0 : index
    %c0_1 = arith.constant 0 : index
    %3 = vector.load %arg8[%c0, %c0_1] : memref<256x128xf32, #tpu.memory_space<vmem>>, vector<256x128xf32>
    %c0_2 = arith.constant 0 : index
    %c0_3 = arith.constant 0 : index
    %4 = vector.load %arg5[%c0_2, %c0_3] : memref<128x384xf32, #tpu.memory_space<vmem>>, vector<128x384xf32>
    %cst = arith.constant dense<0.000000e+00> : vector<256x384xf32>
    %5 = tpu.matmul %3, %4, %cst {dimension_numbers = #tpu.dot_dimension_numbers<[1], [0], [0], [1], [0, 0, 1, 1], [], []>} : vector<256x128xf32>, vector<128x384xf32>, vector<256x384xf32> -> vector<256x384xf32>
    %c0_4 = arith.constant 0 : index
    %c0_5 = arith.constant 0 : index
    %6 = vector.load %arg6[%c0_4, %c0_5] : memref<1x384xf32, #tpu.memory_space<vmem>>, vector<1x384xf32>
    %7 = vector.broadcast %6 : vector<1x384xf32> to vector<256x384xf32>
    %8 = arith.addf %5, %7 : vector<256x384xf32>
    %c0_6 = arith.constant 0 : index
    %c0_7 = arith.constant 0 : index
    %9 = vector.load %arg7[%c0_6, %c0_7] : memref<256x384xf32, #tpu.memory_space<vmem>>, vector<256x384xf32>
    tpu.vector_store %arg7[%c0_6, %c0_7], %8 {strides = array<i32>} : memref<256x384xf32, #tpu.memory_space<vmem>>, vector<256x384xf32>,
    return
  }
  func.func @transform_0(%arg0: i32, %arg1: i32) -> (i32, i32) {
    %c0_i32 = arith.constant 0 : i32
    %c0_i32_0 = arith.constant 0 : i32
    return %arg0, %c0_i32 : i32, i32
  }
  func.func @transform_1(%arg0: i32, %arg1: i32) -> (i32, i32) {
    %c0_i32 = arith.constant 0 : i32
    %c0_i32_0 = arith.constant 0 : i32
    %c0_i32_1 = arith.constant 0 : i32
    return %c0_i32, %c0_i32_0 : i32, i32
  }
  func.func @transform_2(%arg0: i32, %arg1: i32) -> (i32, i32) {
    %c0_i32 = arith.constant 0 : i32
    %c0_i32_0 = arith.constant 0 : i32
    %c0_i32_1 = arith.constant 0 : i32
    return %c0_i32, %c0_i32_0 : i32, i32
  }
  func.func @transform_3(%arg0: i32, %arg1: i32) -> (i32, i32) {
    %c0_i32 = arith.constant 0 : i32
    %c0_i32_0 = arith.constant 0 : i32
    return %c0_i32, %arg1 : i32, i32
  }
  func.func @transform_4(%arg0: i32, %arg1: i32) -> (i32, i32) {
    %c0_i32 = arith.constant 0 : i32
    %c0_i32_0 = arith.constant 0 : i32
    return %c0_i32, %arg1 : i32, i32
  }
  func.func @transform_5(%arg0: i32, %arg1: i32) -> (i32, i32) {
    %c0_i32 = arith.constant 0 : i32
    return %arg0, %arg1 : i32, i32
  }
}

</mosaic_0001>

<llo_original>
// kernel: tpu_custom_call.1
$region0: #{tpu_custom_call.1}
  #allocation0 [shape = 'u32[]', space=smem, size = 0x4, offset = 0x4, fixed_abs, tag = 'smem constant byte address 0x4 - core index']
  #allocation1 [shape = 'u32[144,128]{1,0:T(1,128)}', space=vmem, size = 0x12000, scoped, tag = 'internal scratch']
  #allocation2 [shape = 'f32[256,128]{1,0:T(8,128)}', space=vmem, size = 0x20000, scoped, tag = 'scratch operand']
  %s0 = inlined_call_operand.hbm [shape: f32[512,128], index: 0, kind: input, shape index: {}]
  %s1 = inlined_call_operand.vmem [shape: f32[1,128], index: 1, kind: input, shape index: {}]
  %s2 = inlined_call_operand.vmem [shape: f32[1,128], index: 2, kind: input, shape index: {}]
  %s3 = inlined_call_operand.hbm [shape: f32[128,384], index: 3, kind: input, shape index: {}]
  %s4 = inlined_call_operand.vmem [shape: f32[1,384], index: 4, kind: input, shape index: {}]
  %s5 = inlined_call_operand.hbm [shape: f32[512,384], index: 5, kind: output, shape index: {}]
  %s6 = sld [smem:[#allocation0]]
  $region65: #{tpu_custom_call.1} parent=0
    _
  %s8 = ssub.s32 1, %s6
  %s9 = scalar_select 0, %s8, %s6
  $region1: #{tpu_custom_call.1} parent=0
    #allocation3 [shape = 'u8[262144]{0}', space=vmem, size = 0x40000, scoped, tag = 'input window, operand 0']
    #allocation4 [shape = 's32[2]{0}', space=sflag, size = 0x8, scoped, tag = 'scoped memory for tpu_custom_call.1']
    #allocation5 [shape = 's32[2]{0}', space=sflag, size = 0x8, scoped, tag = 'scoped memory for tpu_custom_call.1']
    #allocation6 [shape = 'u8[196608]{0}', space=vmem, size = 0x30000, scoped, tag = 'input window, operand 3, single buffered']
    #allocation7 [shape = 's32[1]{0}', space=sflag, size = 0x4, scoped, tag = 'scoped memory for tpu_custom_call.1']
    #allocation8 [shape = 'u8[786432]{0}', space=vmem, size = 0xc0000, scoped, tag = 'output window, operand 0']
    %10 = vsyncpa [#allocation4], 0
    %s11 = scalar_lea.sflag [#allocation4], 1
    %12 = vsyncpa %s11, 0
    %13 = vsyncpa [#allocation7], 0
    %14 = vsyncpa [#allocation5], 0
    %s15 = scalar_lea.sflag [#allocation5], 1
    %16 = vsyncpa %s15, 0
    loop: start=0, step=1, limit=4
    $region2: #{tpu_custom_call.1} parent=1 // loop_pre_header
      _
    $region3: #{tpu_custom_call.1} parent=1 // loop_header
      %s18 = sphi 0, %s22
      %p19 = scmp.ge.s32.totalorder %s18, 4
      %s25 = sphi 0, %s37
      %s26 = sphi 0, %s33
      %s27 = sphi 0, %s25
      %s28 = sphi 0, %s26
      %s29 = sphi 0, %s27
      %s30 = sphi 0, %s28
      %s40 = sphi 0, %s42
      %s43 = sphi 0, %s40
      %s44 = sphi 0, %s43
      %s60 = sphi 0, %s44
      %s64 = sphi 0, %s64
      %s66 = sphi 0, %s64
      %s67 = sphi 0, %s66
      %s81 = sphi 0, %s67
      %s85 = sphi 0, %s85
      %s87 = sphi 0, %s85
      %s88 = sphi 0, %s87
      %s102 = sphi 0, %s88
      %s108 = sphi 0, %s110
      %s111 = sphi 0, %s108
      %s112 = sphi 0, %s111
      %s128 = sphi 0, %s112
      %s134 = sphi 0, %s136
      %s137 = sphi 0, %s134
      %s138 = sphi 0, %s137
      %s154 = sphi 0, %s138
      %s162 = sphi 0, %s164
      %s165 = sphi 0, %s162
      %s166 = sphi 0, %s165
      %s182 = sphi 0, %s166
    $region4: #{tpu_custom_call.1} parent=1 // loop_header_branch
      %21 = sbr.rel (%p19) target = $region8
    $region5: #{tpu_custom_call.1} parent=1 // loop_body
      %s23 = ssub.s32 %s18, 1
      %s24 = ssub.s32 %s18, 2
      %s31 = sadd.s32 1, %s26
      %p32 = scmp.ge.s32.totalorder %s31, 1
      %s33 = scalar_select %p32, 0, %s31
      %s34 = sadd.s32 1, %s25
      %s35 = scalar_select %p32, %s34, %s25
      %p36 = scmp.ge.s32.totalorder %s35, 2
      %s37 = scalar_select %p36, 0, %s35
      %s38 = ssub.s32 %s25, %s37
      %p39 = scmp.eq.s32.totalorder %s38, 0
      %s41 = sadd.s32 %s40, 1
      %s42 = scalar_select %p39, %s40, %s41
      %p45 = pneg %p39
      %p46 = scmp.eq.s32.totalorder %s18, 1
      %p47 = por %p45, %p46
      %p48 = scmp.ne.s32.totalorder %s40, %s43
      %p49 = scmp.eq.s32.totalorder %s18, 0
      %p50 = por %p48, %p49
      %p51 = scmp.ne.s32.totalorder %s40, %s43
      %p52 = scmp.eq.s32.totalorder %s23, 1
      %p53 = por %p51, %p52
      %p54 = scmp.ne.s32.totalorder %s43, %s44
      %p55 = scmp.eq.s32.totalorder %s23, 0
      %p56 = por %p54, %p55
      %p57 = scmp.ne.s32.totalorder %s43, %s44
      %p58 = scmp.eq.s32.totalorder %s24, 1
      %p59 = por %p57, %p58
      %p61 = scmp.ne.s32.totalorder %s44, %s60
      %p62 = scmp.eq.s32.totalorder %s24, 0
      %p63 = por %p61, %p62
      %s65 = sadd.s32 %s64, 1
      %p68 = scmp.eq.s32.totalorder %s18, 1
      %p69 = scmp.ne.s32.totalorder %s64, %s66
      %p70 = scmp.eq.s32.totalorder %s18, 0
      %p71 = por %p69, %p70
      %p72 = scmp.ne.s32.totalorder %s64, %s66
      %p73 = scmp.eq.s32.totalorder %s23, 1
      %p74 = por %p72, %p73
      %p75 = scmp.ne.s32.totalorder %s66, %s67
      %p76 = scmp.eq.s32.totalorder %s23, 0
      %p77 = por %p75, %p76
      %p78 = scmp.ne.s32.totalorder %s66, %s67
      %p79 = scmp.eq.s32.totalorder %s24, 1
      %p80 = por %p78, %p79
      %p82 = scmp.ne.s32.totalorder %s67, %s81
      %p83 = scmp.eq.s32.totalorder %s24, 0
      %p84 = por %p82, %p83
      %s86 = sadd.s32 %s85, 1
      %p89 = scmp.eq.s32.totalorder %s18, 1
      %p90 = scmp.ne.s32.totalorder %s85, %s87
      %p91 = scmp.eq.s32.totalorder %s18, 0
      %p92 = por %p90, %p91
      %p93 = scmp.ne.s32.totalorder %s85, %s87
      %p94 = scmp.eq.s32.totalorder %s23, 1
      %p95 = por %p93, %p94
      %p96 = scmp.ne.s32.totalorder %s87, %s88
      %p97 = scmp.eq.s32.totalorder %s23, 0
      %p98 = por %p96, %p97
      %p99 = scmp.ne.s32.totalorder %s87, %s88
      %p100 = scmp.eq.s32.totalorder %s24, 1
      %p101 = por %p99, %p100
      %p103 = scmp.ne.s32.totalorder %s88, %s102
      %p104 = scmp.eq.s32.totalorder %s24, 0
      %p105 = por %p103, %p104
      %s106 = ssub.s32 %s26, %s33
      %p107 = scmp.eq.s32.totalorder %s106, 0
      %s109 = sadd.s32 %s108, 1
      %s110 = scalar_select %p107, %s108, %s109
      %p113 = pneg %p107
      %p114 = scmp.eq.s32.totalorder %s18, 1
      %p115 = por %p113, %p114
      %p116 = scmp.ne.s32.totalorder %s108, %s111
      %p117 = scmp.eq.s32.totalorder %s18, 0
      %p118 = por %p116, %p117
      %p119 = scmp.ne.s32.totalorder %s108, %s111
      %p120 = scmp.eq.s32.totalorder %s23, 1
      %p121 = por %p119, %p120
      %p122 = scmp.ne.s32.totalorder %s111, %s112
      %p123 = scmp.eq.s32.totalorder %s23, 0
      %p124 = por %p122, %p123
      %p125 = scmp.ne.s32.totalorder %s111, %s112
      %p126 = scmp.eq.s32.totalorder %s24, 1
      %p127 = por %p125, %p126
      %p129 = scmp.ne.s32.totalorder %s112, %s128
      %p130 = scmp.eq.s32.totalorder %s24, 0
      %p131 = por %p129, %p130
      %s132 = ssub.s32 %s26, %s33
      %p133 = scmp.eq.s32.totalorder %s132, 0
      %s135 = sadd.s32 %s134, 1
      %s136 = scalar_select %p133, %s134, %s135
      %p139 = pneg %p133
      %p140 = scmp.eq.s32.totalorder %s18, 1
      %p141 = por %p139, %p140
      %p142 = scmp.ne.s32.totalorder %s134, %s137
      %p143 = scmp.eq.s32.totalorder %s18, 0
      %p144 = por %p142, %p143
      %p145 = scmp.ne.s32.totalorder %s134, %s137
      %p146 = scmp.eq.s32.totalorder %s23, 1
      %p147 = por %p145, %p146
      %p148 = scmp.ne.s32.totalorder %s137, %s138
      %p149 = scmp.eq.s32.totalorder %s23, 0
      %p150 = por %p148, %p149
      %p151 = scmp.ne.s32.totalorder %s137, %s138
      %p152 = scmp.eq.s32.totalorder %s24, 1
      %p153 = por %p151, %p152
      %p155 = scmp.ne.s32.totalorder %s138, %s154
      %p156 = scmp.eq.s32.totalorder %s24, 0
      %p157 = por %p155, %p156
      %s158 = ssub.s32 %s25, %s37
      %s159 = ssub.s32 %s26, %s33
      %s160 = sor.u32 %s158, %s159
      %p161 = scmp.eq.s32.totalorder %s160, 0
      %s163 = sadd.s32 %s162, 1
      %s164 = scalar_select %p161, %s162, %s163
      %p167 = pneg %p161
      %p168 = scmp.eq.s32.totalorder %s18, 1
      %p169 = por %p167, %p168
      %p170 = scmp.ne.s32.totalorder %s162, %s165
      %p171 = scmp.eq.s32.totalorder %s18, 0
      %p172 = por %p170, %p171
      %p173 = scmp.ne.s32.totalorder %s162, %s165
      %p174 = scmp.eq.s32.totalorder %s23, 1
      %p175 = por %p173, %p174
      %p176 = scmp.ne.s32.totalorder %s165, %s166
      %p177 = scmp.eq.s32.totalorder %s23, 0
      %p178 = por %p176, %p177
      %p179 = scmp.ne.s32.totalorder %s165, %s166
      %p180 = scmp.eq.s32.totalorder %s24, 1
      %p181 = por %p179, %p180
      %p183 = scmp.ne.s32.totalorder %s166, %s182
      %p184 = scmp.eq.s32.totalorder %s24, 0
      %p185 = por %p183, %p184
      %p186 = scmp.le.s32.totalorder 1, %s18
      %p187 = scmp.lt.s32.totalorder %s18, 3
      %p188 = pnand %p186, %p187
      %p189 = pneg %p188
      // Predicated region
      $region9: #{tpu_custom_call.1} parent=5 // pred_check
        _
      $region10: #{tpu_custom_call.1} parent=5 // pred_check_branch
        %191 = sbr.rel (%p188) target = $region12
      $region11: #{tpu_custom_call.1} parent=5 // pred_region
        %s192 = ssub.s32 %s18, 1
        // Predicated region
        $region13: #{tpu_custom_call.1} parent=11 // pred_check
          %p193 = pneg %p77
        $region14: #{tpu_custom_call.1} parent=11 // pred_check_branch
          %195 = sbr.rel (%p193) target = $region16
        $region15: #{tpu_custom_call.1} parent=11 // pred_region
          _
        $region16: #{tpu_custom_call.1} parent=11 // pred_fallthru
          _
        // Predicated region
        $region17: #{tpu_custom_call.1} parent=11 // pred_check
          %p196 = pneg %p98
        $region18: #{tpu_custom_call.1} parent=11 // pred_check_branch
          %198 = sbr.rel (%p196) target = $region20
        $region19: #{tpu_custom_call.1} parent=11 // pred_region
          _
        $region20: #{tpu_custom_call.1} parent=11 // pred_fallthru
          _
        // Predicated region
        $region21: #{tpu_custom_call.1} parent=11 // pred_check
          %p199 = pneg %p124
        $region22: #{tpu_custom_call.1} parent=11 // pred_check_branch
          %201 = sbr.rel (%p199) target = $region24
        $region23: #{tpu_custom_call.1} parent=11 // pred_region
          %s202 = smul.u32 3, %s28
          %s204 = ssub.s32 6144, 6144
          %205 = vsyncadd [#allocation7], %s204
          %s206 = smul.addr %s202, 128
          %s207 = scalar_lea.hbm %s3, %s206
          %s208 = sshll.u32 [#allocation6], 4
          %s209 = int_to_ptr.vmem [resolvable:$true] %s208
          %214 = dma.hbm_to_vmem [thread:$0]  %s207, 6144, %s209, [#allocation7], 384, 384, 24
        $region24: #{tpu_custom_call.1} parent=11 // pred_fallthru
          _
        // Predicated region
        $region25: #{tpu_custom_call.1} parent=11 // pred_check
          %p215 = pneg %p150
        $region26: #{tpu_custom_call.1} parent=11 // pred_check_branch
          %217 = sbr.rel (%p215) target = $region28
        $region27: #{tpu_custom_call.1} parent=11 // pred_region
          %s218 = smul.u32 3, %s28
          %p219 = scmp.lt.s32.totalorder %s218, 2
          %s220 = scalar_select %p219, %s218, 2
          %s221 = scalar_lea.vmem %s4, %s220
          %s222 = smul.u32 3, %s28
        $region28: #{tpu_custom_call.1} parent=11 // pred_fallthru
          _
      $region12: #{tpu_custom_call.1} parent=5 // pred_fallthru
        _
      %p223 = scmp.lt.s32.totalorder %s18, 2
      // Predicated region
      $region29: #{tpu_custom_call.1} parent=5 // pred_check
        %p224 = pneg %p223
      $region30: #{tpu_custom_call.1} parent=5 // pred_check_branch
        %226 = sbr.rel (%p224) target = $region32
      $region31: #{tpu_custom_call.1} parent=5 // pred_region
        // Predicated region
        $region33: #{tpu_custom_call.1} parent=31 // pred_check
          %p227 = pneg %p50
        $region34: #{tpu_custom_call.1} parent=31 // pred_check_branch
          %229 = sbr.rel (%p227) target = $region36
        $region35: #{tpu_custom_call.1} parent=31 // pred_region
          %s230 = sand.u32 %s40, 1
          %s231 = scalar_lea.sflag [#allocation4], %s230
          %s232 = sand.u32 %s40, 1
          %s233 = smul.addr %s232, 256
          %s234 = scalar_lea.vmem [#allocation3], %s233
          %s235 = smul.u32 32, %s25
          %s237 = ssub.s32 4096, 4096
          %238 = vsyncadd %s231, %s237
          %s239 = smul.addr %s235, 128
          %s240 = scalar_lea.hbm %s0, %s239
          %s241 = sshll.u32 %s234, 4
          %s242 = int_to_ptr.vmem [resolvable:$true] %s241
          %247 = dma.hbm_to_vmem [thread:$0]  %s240, 4096, %s242, %s231, 128, 128, 8
        $region36: #{tpu_custom_call.1} parent=31 // pred_fallthru
          _
      $region32: #{tpu_custom_call.1} parent=5 // pred_fallthru
        _
      %p248 = scmp.le.s32.totalorder 1, %s18
      %p249 = scmp.lt.s32.totalorder %s18, 3
      %p250 = pnand %p248, %p249
      %p251 = pneg %p250
      // Predicated region
      $region37: #{tpu_custom_call.1} parent=5 // pred_check
        _
      $region38: #{tpu_custom_call.1} parent=5 // pred_check_branch
        %253 = sbr.rel (%p250) target = $region40
      $region39: #{tpu_custom_call.1} parent=5 // pred_region
        %s254 = ssub.s32 %s18, 1
        %s255 = sand.u32 %s43, 1
        %s256 = scalar_lea.sflag [#allocation4], %s255
        %s257 = sand.u32 %s43, 1
        %s258 = smul.addr %s257, 256
        %s259 = scalar_lea.vmem [#allocation3], %s258
        // Predicated region
        $region41: #{tpu_custom_call.1} parent=39 // pred_check
          %p260 = pneg %p56
        $region42: #{tpu_custom_call.1} parent=39 // pred_check_branch
          %262 = sbr.rel (%p260) target = $region44
        $region43: #{tpu_custom_call.1} parent=39 // pred_region
          %263 = dma.done %s256, 4096
        $region44: #{tpu_custom_call.1} parent=39 // pred_fallthru
          _
        // Predicated region
        $region45: #{tpu_custom_call.1} parent=39 // pred_check
          %p264 = pneg %p124
        $region46: #{tpu_custom_call.1} parent=39 // pred_check_branch
          %266 = sbr.rel (%p264) target = $region48
        $region47: #{tpu_custom_call.1} parent=39 // pred_region
          %267 = dma.done [#allocation7], 6144
        $region48: #{tpu_custom_call.1} parent=39 // pred_fallthru
          _
        %s268 = sand.u32 %s43, 1
        %s269 = scalar_lea.sflag [#allocation4], %s268
        %s270 = sand.u32 %s43, 1
        %s271 = smul.addr %s270, 256
        %s272 = scalar_lea.vmem [#allocation3], %s271
        %p273 = pneg %p56
        %p274 = pneg %p53
        %p275 = pneg %p77
        %p276 = pneg %p74
        %p277 = pneg %p98
        %p278 = pneg %p95
        %p279 = pneg %p124
        %p280 = pneg %p121
        %s281 = smul.u32 3, %s28
        %p282 = scmp.lt.s32.totalorder %s281, 2
        %s283 = scalar_select %p282, %s281, 2
        %s284 = scalar_lea.vmem %s4, %s283
        %p285 = pneg %p150
        %p286 = pneg %p147
        %p287 = pneg %p178
        %p288 = pneg %p175
        %s289 = sand.u32 %s165, 1
        %s290 = scalar_lea.sflag [#allocation5], %s289
        %s291 = sand.u32 %s165, 1
        %s292 = smul.addr %s291, 768
        %s293 = scalar_lea.vmem [#allocation8], %s292
        %s294 = smul.u32 32, %s27
        %s295 = smul.u32 3, %s28
        %s296 = smul.u32 3, %s28
        %p297 = scmp.lt.s32.totalorder %s296, 2
        %s298 = scalar_select %p297, %s296, 2
        %s299 = scalar_lea.vmem %s4, %s298
        %s300 = smul.u32 3, %s28
        %s301 = smul.u32 32, %s27
        %s302 = smul.u32 3, %s28
        %p303 = scmp.eq.s32.totalorder %s28, 0
        // Predicated region
        $region49: #{tpu_custom_call.1} parent=39 // pred_check
          %p304 = pneg %p303
        $region50: #{tpu_custom_call.1} parent=39 // pred_check_branch
          %306 = sbr.rel (%p304) target = $region52
        $region51: #{tpu_custom_call.1} parent=39 // pred_region
          %v307 = vld [vmem:[%s259] sm:$0xff]
          %v308 = vld [vmem:[%s259 + $0x8] sm:$0xff]
          %v309 = vld [vmem:[%s259 + $0x10] sm:$0xff]
          %v310 = vld [vmem:[%s259 + $0x18] sm:$0xff]
          %v311 = vld [vmem:[%s259 + $0x20] sm:$0xff]
          %v312 = vld [vmem:[%s259 + $0x28] sm:$0xff]
          %v313 = vld [vmem:[%s259 + $0x30] sm:$0xff]
          %v314 = vld [vmem:[%s259 + $0x38] sm:$0xff]
          %v315 = vld [vmem:[%s259 + $0x40] sm:$0xff]
          %v316 = vld [vmem:[%s259 + $0x48] sm:$0xff]
          %v317 = vld [vmem:[%s259 + $0x50] sm:$0xff]
          %v318 = vld [vmem:[%s259 + $0x58] sm:$0xff]
          %v319 = vld [vmem:[%s259 + $0x60] sm:$0xff]
          %v320 = vld [vmem:[%s259 + $0x68] sm:$0xff]
          %v321 = vld [vmem:[%s259 + $0x70] sm:$0xff]
          %v322 = vld [vmem:[%s259 + $0x78] sm:$0xff]
          %v323 = vld [vmem:[%s259 + $0x80] sm:$0xff]
          %v324 = vld [vmem:[%s259 + $0x88] sm:$0xff]
          %v325 = vld [vmem:[%s259 + $0x90] sm:$0xff]
          %v326 = vld [vmem:[%s259 + $0x98] sm:$0xff]
          %v327 = vld [vmem:[%s259 + $0xa0] sm:$0xff]
          %v328 = vld [vmem:[%s259 + $0xa8] sm:$0xff]
          %v329 = vld [vmem:[%s259 + $0xb0] sm:$0xff]
          %v330 = vld [vmem:[%s259 + $0xb8] sm:$0xff]
          %v331 = vld [vmem:[%s259 + $0xc0] sm:$0xff]
          %v332 = vld [vmem:[%s259 + $0xc8] sm:$0xff]
          %v333 = vld [vmem:[%s259 + $0xd0] sm:$0xff]
          %v334 = vld [vmem:[%s259 + $0xd8] sm:$0xff]
          %v335 = vld [vmem:[%s259 + $0xe0] sm:$0xff]
          %v336 = vld [vmem:[%s259 + $0xe8] sm:$0xff]
          %v337 = vld [vmem:[%s259 + $0xf0] sm:$0xff]
          %v338 = vld [vmem:[%s259 + $0xf8] sm:$0xff]
          %v339 = vld [vmem:[%s1] sm:$0x1]
          %v340 = vld [vmem:[%s2] sm:$0x1]
          %341 = vadd.xlane.f32.xlu0 %v307
          %v342 = vpop.xlane.xlu0 %341
          %343 = vadd.xlane.f32.xlu0 %v308
          %v344 = vpop.xlane.xlu0 %343
          %345 = vadd.xlane.f32.xlu0 %v309
          %v346 = vpop.xlane.xlu0 %345
          %347 = vadd.xlane.f32.xlu0 %v310
          %v348 = vpop.xlane.xlu0 %347
          %349 = vadd.xlane.f32.xlu0 %v311
          %v350 = vpop.xlane.xlu0 %349
          %351 = vadd.xlane.f32.xlu0 %v312
          %v352 = vpop.xlane.xlu0 %351
          %353 = vadd.xlane.f32.xlu0 %v313
          %v354 = vpop.xlane.xlu0 %353
          %355 = vadd.xlane.f32.xlu0 %v314
          %v356 = vpop.xlane.xlu0 %355
          %357 = vadd.xlane.f32.xlu0 %v315
          %v358 = vpop.xlane.xlu0 %357
          %359 = vadd.xlane.f32.xlu0 %v316
          %v360 = vpop.xlane.xlu0 %359
          %361 = vadd.xlane.f32.xlu0 %v317
          %v362 = vpop.xlane.xlu0 %361
          %363 = vadd.xlane.f32.xlu0 %v318
          %v364 = vpop.xlane.xlu0 %363
          %365 = vadd.xlane.f32.xlu0 %v319
          %v366 = vpop.xlane.xlu0 %365
          %367 = vadd.xlane.f32.xlu0 %v320
          %v368 = vpop.xlane.xlu0 %367
          %369 = vadd.xlane.f32.xlu0 %v321
          %v370 = vpop.xlane.xlu0 %369
          %371 = vadd.xlane.f32.xlu0 %v322
          %v372 = vpop.xlane.xlu0 %371
          %373 = vadd.xlane.f32.xlu0 %v323
          %v374 = vpop.xlane.xlu0 %373
          %375 = vadd.xlane.f32.xlu0 %v324
          %v376 = vpop.xlane.xlu0 %375
          %377 = vadd.xlane.f32.xlu0 %v325
          %v378 = vpop.xlane.xlu0 %377
          %379 = vadd.xlane.f32.xlu0 %v326
          %v380 = vpop.xlane.xlu0 %379
          %381 = vadd.xlane.f32.xlu0 %v327
          %v382 = vpop.xlane.xlu0 %381
          %383 = vadd.xlane.f32.xlu0 %v328
          %v384 = vpop.xlane.xlu0 %383
          %385 = vadd.xlane.f32.xlu0 %v329
          %v386 = vpop.xlane.xlu0 %385
          %387 = vadd.xlane.f32.xlu0 %v330
          %v388 = vpop.xlane.xlu0 %387
          %389 = vadd.xlane.f32.xlu0 %v331
          %v390 = vpop.xlane.xlu0 %389
          %391 = vadd.xlane.f32.xlu0 %v332
          %v392 = vpop.xlane.xlu0 %391
          %393 = vadd.xlane.f32.xlu0 %v333
          %v394 = vpop.xlane.xlu0 %393
          %395 = vadd.xlane.f32.xlu0 %v334
          %v396 = vpop.xlane.xlu0 %395
          %397 = vadd.xlane.f32.xlu0 %v335
          %v398 = vpop.xlane.xlu0 %397
          %399 = vadd.xlane.f32.xlu0 %v336
          %v400 = vpop.xlane.xlu0 %399
          %401 = vadd.xlane.f32.xlu0 %v337
          %v402 = vpop.xlane.xlu0 %401
          %403 = vadd.xlane.f32.xlu0 %v338
          %v404 = vpop.xlane.xlu0 %403
          %v405 = vrcp.pop 128.0
          %v406 = vmul.f32 %v342, %v405
          %v407 = vmul.f32 %v344, %v405
          %v408 = vmul.f32 %v346, %v405
          %v409 = vmul.f32 %v348, %v405
          %v410 = vmul.f32 %v350, %v405
          %v411 = vmul.f32 %v352, %v405
          %v412 = vmul.f32 %v354, %v405
          %v413 = vmul.f32 %v356, %v405
          %v414 = vmul.f32 %v358, %v405
          %v415 = vmul.f32 %v360, %v405
          %v416 = vmul.f32 %v362, %v405
          %v417 = vmul.f32 %v364, %v405
          %v418 = vmul.f32 %v366, %v405
          %v419 = vmul.f32 %v368, %v405
          %v420 = vmul.f32 %v370, %v405
          %v421 = vmul.f32 %v372, %v405
          %v422 = vmul.f32 %v374, %v405
          %v423 = vmul.f32 %v376, %v405
          %v424 = vmul.f32 %v378, %v405
          %v425 = vmul.f32 %v380, %v405
          %v426 = vmul.f32 %v382, %v405
          %v427 = vmul.f32 %v384, %v405
          %v428 = vmul.f32 %v386, %v405
          %v429 = vmul.f32 %v388, %v405
          %v430 = vmul.f32 %v390, %v405
          %v431 = vmul.f32 %v392, %v405
          %v432 = vmul.f32 %v394, %v405
          %v433 = vmul.f32 %v396, %v405
          %v434 = vmul.f32 %v398, %v405
          %v435 = vmul.f32 %v400, %v405
          %v436 = vmul.f32 %v402, %v405
          %v437 = vmul.f32 %v404, %v405
          %v438 = vsub.f32 %v307, %v406
          %v439 = vsub.f32 %v308, %v407
          %v440 = vsub.f32 %v309, %v408
          %v441 = vsub.f32 %v310, %v409
          %v442 = vsub.f32 %v311, %v410
          %v443 = vsub.f32 %v312, %v411
          %v444 = vsub.f32 %v313, %v412
          %v445 = vsub.f32 %v314, %v413
          %v446 = vsub.f32 %v315, %v414
          %v447 = vsub.f32 %v316, %v415
          %v448 = vsub.f32 %v317, %v416
          %v449 = vsub.f32 %v318, %v417
          %v450 = vsub.f32 %v319, %v418
          %v451 = vsub.f32 %v320, %v419
          %v452 = vsub.f32 %v321, %v420
          %v453 = vsub.f32 %v322, %v421
          %v454 = vsub.f32 %v323, %v422
          %v455 = vsub.f32 %v324, %v423
          %v456 = vsub.f32 %v325, %v424
          %v457 = vsub.f32 %v326, %v425
          %v458 = vsub.f32 %v327, %v426
          %v459 = vsub.f32 %v328, %v427
          %v460 = vsub.f32 %v329, %v428
          %v461 = vsub.f32 %v330, %v429
          %v462 = vsub.f32 %v331, %v430
          %v463 = vsub.f32 %v332, %v431
          %v464 = vsub.f32 %v333, %v432
          %v465 = vsub.f32 %v334, %v433
          %v466 = vsub.f32 %v335, %v434
          %v467 = vsub.f32 %v336, %v435
          %v468 = vsub.f32 %v337, %v436
          %v469 = vsub.f32 %v338, %v437
          %v470 = vmul.f32 %v438, %v438
          %v471 = vmul.f32 %v439, %v439
          %v472 = vmul.f32 %v440, %v440
          %v473 = vmul.f32 %v441, %v441
          %v474 = vmul.f32 %v442, %v442
          %v475 = vmul.f32 %v443, %v443
          %v476 = vmul.f32 %v444, %v444
          %v477 = vmul.f32 %v445, %v445
          %v478 = vmul.f32 %v446, %v446
          %v479 = vmul.f32 %v447, %v447
          %v480 = vmul.f32 %v448, %v448
          %v481 = vmul.f32 %v449, %v449
          %v482 = vmul.f32 %v450, %v450
          %v483 = vmul.f32 %v451, %v451
          %v484 = vmul.f32 %v452, %v452
          %v485 = vmul.f32 %v453, %v453
          %v486 = vmul.f32 %v454, %v454
          %v487 = vmul.f32 %v455, %v455
          %v488 = vmul.f32 %v456, %v456
          %v489 = vmul.f32 %v457, %v457
          %v490 = vmul.f32 %v458, %v458
          %v491 = vmul.f32 %v459, %v459
          %v492 = vmul.f32 %v460, %v460
          %v493 = vmul.f32 %v461, %v461
          %v494 = vmul.f32 %v462, %v462
          %v495 = vmul.f32 %v463, %v463
          %v496 = vmul.f32 %v464, %v464
          %v497 = vmul.f32 %v465, %v465
          %v498 = vmul.f32 %v466, %v466
          %v499 = vmul.f32 %v467, %v467
          %v500 = vmul.f32 %v468, %v468
          %v501 = vmul.f32 %v469, %v469
          %502 = vadd.xlane.f32.xlu0 %v470
          %v503 = vpop.xlane.xlu0 %502
          %504 = vadd.xlane.f32.xlu0 %v471
          %v505 = vpop.xlane.xlu0 %504
          %506 = vadd.xlane.f32.xlu0 %v472
          %v507 = vpop.xlane.xlu0 %506
          %508 = vadd.xlane.f32.xlu0 %v473
          %v509 = vpop.xlane.xlu0 %508
          %510 = vadd.xlane.f32.xlu0 %v474
          %v511 = vpop.xlane.xlu0 %510
          %512 = vadd.xlane.f32.xlu0 %v475
          %v513 = vpop.xlane.xlu0 %512
          %514 = vadd.xlane.f32.xlu0 %v476
          %v515 = vpop.xlane.xlu0 %514
          %516 = vadd.xlane.f32.xlu0 %v477
          %v517 = vpop.xlane.xlu0 %516
          %518 = vadd.xlane.f32.xlu0 %v478
          %v519 = vpop.xlane.xlu0 %518
          %520 = vadd.xlane.f32.xlu0 %v479
          %v521 = vpop.xlane.xlu0 %520
          %522 = vadd.xlane.f32.xlu0 %v480
          %v523 = vpop.xlane.xlu0 %522
          %524 = vadd.xlane.f32.xlu0 %v481
          %v525 = vpop.xlane.xlu0 %524
          %526 = vadd.xlane.f32.xlu0 %v482
          %v527 = vpop.xlane.xlu0 %526
          %528 = vadd.xlane.f32.xlu0 %v483
          %v529 = vpop.xlane.xlu0 %528
          %530 = vadd.xlane.f32.xlu0 %v484
          %v531 = vpop.xlane.xlu0 %530
          %532 = vadd.xlane.f32.xlu0 %v485
          %v533 = vpop.xlane.xlu0 %532
          %534 = vadd.xlane.f32.xlu0 %v486
          %v535 = vpop.xlane.xlu0 %534
          %536 = vadd.xlane.f32.xlu0 %v487
          %v537 = vpop.xlane.xlu0 %536
          %538 = vadd.xlane.f32.xlu0 %v488
          %v539 = vpop.xlane.xlu0 %538
          %540 = vadd.xlane.f32.xlu0 %v489
          %v541 = vpop.xlane.xlu0 %540
          %542 = vadd.xlane.f32.xlu0 %v490
          %v543 = vpop.xlane.xlu0 %542
          %544 = vadd.xlane.f32.xlu0 %v491
          %v545 = vpop.xlane.xlu0 %544
          %546 = vadd.xlane.f32.xlu0 %v492
          %v547 = vpop.xlane.xlu0 %546
          %548 = vadd.xlane.f32.xlu0 %v493
          %v549 = vpop.xlane.xlu0 %548
          %550 = vadd.xlane.f32.xlu0 %v494
          %v551 = vpop.xlane.xlu0 %550
          %552 = vadd.xlane.f32.xlu0 %v495
          %v553 = vpop.xlane.xlu0 %552
          %554 = vadd.xlane.f32.xlu0 %v496
          %v555 = vpop.xlane.xlu0 %554
          %556 = vadd.xlane.f32.xlu0 %v497
          %v557 = vpop.xlane.xlu0 %556
          %558 = vadd.xlane.f32.xlu0 %v498
          %v559 = vpop.xlane.xlu0 %558
          %560 = vadd.xlane.f32.xlu0 %v499
          %v561 = vpop.xlane.xlu0 %560
          %562 = vadd.xlane.f32.xlu0 %v500
          %v563 = vpop.xlane.xlu0 %562
          %564 = vadd.xlane.f32.xlu0 %v501
          %v565 = vpop.xlane.xlu0 %564
          %v566 = vmul.f32 %v503, %v405
          %v567 = vmul.f32 %v505, %v405
          %v568 = vmul.f32 %v507, %v405
          %v569 = vmul.f32 %v509, %v405
          %v570 = vmul.f32 %v511, %v405
          %v571 = vmul.f32 %v513, %v405
          %v572 = vmul.f32 %v515, %v405
          %v573 = vmul.f32 %v517, %v405
          %v574 = vmul.f32 %v519, %v405
          %v575 = vmul.f32 %v521, %v405
          %v576 = vmul.f32 %v523, %v405
          %v577 = vmul.f32 %v525, %v405
          %v578 = vmul.f32 %v527, %v405
          %v579 = vmul.f32 %v529, %v405
          %v580 = vmul.f32 %v531, %v405
          %v581 = vmul.f32 %v533, %v405
          %v582 = vmul.f32 %v535, %v405
          %v583 = vmul.f32 %v537, %v405
          %v584 = vmul.f32 %v539, %v405
          %v585 = vmul.f32 %v541, %v405
          %v586 = vmul.f32 %v543, %v405
          %v587 = vmul.f32 %v545, %v405
          %v588 = vmul.f32 %v547, %v405
          %v589 = vmul.f32 %v549, %v405
          %v590 = vmul.f32 %v551, %v405
          %v591 = vmul.f32 %v553, %v405
          %v592 = vmul.f32 %v555, %v405
          %v593 = vmul.f32 %v557, %v405
          %v594 = vmul.f32 %v559, %v405
          %v595 = vmul.f32 %v561, %v405
          %v596 = vmul.f32 %v563, %v405
          %v597 = vmul.f32 %v565, %v405
          %v598 = vadd.f32 %v566, 1e-05
          %v599 = vadd.f32 %v567, 1e-05
          %v600 = vadd.f32 %v568, 1e-05
          %v601 = vadd.f32 %v569, 1e-05
          %v602 = vadd.f32 %v570, 1e-05
          %v603 = vadd.f32 %v571, 1e-05
          %v604 = vadd.f32 %v572, 1e-05
          %v605 = vadd.f32 %v573, 1e-05
          %v606 = vadd.f32 %v574, 1e-05
          %v607 = vadd.f32 %v575, 1e-05
          %v608 = vadd.f32 %v576, 1e-05
          %v609 = vadd.f32 %v577, 1e-05
          %v610 = vadd.f32 %v578, 1e-05
          %v611 = vadd.f32 %v579, 1e-05
          %v612 = vadd.f32 %v580, 1e-05
          %v613 = vadd.f32 %v581, 1e-05
          %v614 = vadd.f32 %v582, 1e-05
          %v615 = vadd.f32 %v583, 1e-05
          %v616 = vadd.f32 %v584, 1e-05
          %v617 = vadd.f32 %v585, 1e-05
          %v618 = vadd.f32 %v586, 1e-05
          %v619 = vadd.f32 %v587, 1e-05
          %v620 = vadd.f32 %v588, 1e-05
          %v621 = vadd.f32 %v589, 1e-05
          %v622 = vadd.f32 %v590, 1e-05
          %v623 = vadd.f32 %v591, 1e-05
          %v624 = vadd.f32 %v592, 1e-05
          %v625 = vadd.f32 %v593, 1e-05
          %v626 = vadd.f32 %v594, 1e-05
          %v627 = vadd.f32 %v595, 1e-05
          %v628 = vadd.f32 %v596, 1e-05
          %v629 = vadd.f32 %v597, 1e-05
          %v630 = vrsqrt.pop %v598
          %v631 = vrsqrt.pop %v599
          %v632 = vrsqrt.pop %v600
          %v633 = vrsqrt.pop %v601
          %v634 = vrsqrt.pop %v602
          %v635 = vrsqrt.pop %v603
          %v636 = vrsqrt.pop %v604
          %v637 = vrsqrt.pop %v605
          %v638 = vrsqrt.pop %v606
          %v639 = vrsqrt.pop %v607
          %v640 = vrsqrt.pop %v608
          %v641 = vrsqrt.pop %v609
          %v642 = vrsqrt.pop %v610
          %v643 = vrsqrt.pop %v611
          %v644 = vrsqrt.pop %v612
          %v645 = vrsqrt.pop %v613
          %v646 = vrsqrt.pop %v614
          %v647 = vrsqrt.pop %v615
          %v648 = vrsqrt.pop %v616
          %v649 = vrsqrt.pop %v617
          %v650 = vrsqrt.pop %v618
          %v651 = vrsqrt.pop %v619
          %v652 = vrsqrt.pop %v620
          %v653 = vrsqrt.pop %v621
          %v654 = vrsqrt.pop %v622
          %v655 = vrsqrt.pop %v623
          %v656 = vrsqrt.pop %v624
          %v657 = vrsqrt.pop %v625
          %v658 = vrsqrt.pop %v626
          %v659 = vrsqrt.pop %v627
          %v660 = vrsqrt.pop %v628
          %v661 = vrsqrt.pop %v629
          %v662 = vmul.f32 %v438, %v630
          %v663 = vmul.f32 %v439, %v631
          %v664 = vmul.f32 %v440, %v632
          %v665 = vmul.f32 %v441, %v633
          %v666 = vmul.f32 %v442, %v634
          %v667 = vmul.f32 %v443, %v635
          %v668 = vmul.f32 %v444, %v636
          %v669 = vmul.f32 %v445, %v637
          %v670 = vmul.f32 %v446, %v638
          %v671 = vmul.f32 %v447, %v639
          %v672 = vmul.f32 %v448, %v640
          %v673 = vmul.f32 %v449, %v641
          %v674 = vmul.f32 %v450, %v642
          %v675 = vmul.f32 %v451, %v643
          %v676 = vmul.f32 %v452, %v644
          %v677 = vmul.f32 %v453, %v645
          %v678 = vmul.f32 %v454, %v646
          %v679 = vmul.f32 %v455, %v647
          %v680 = vmul.f32 %v456, %v648
          %v681 = vmul.f32 %v457, %v649
          %v682 = vmul.f32 %v458, %v650
          %v683 = vmul.f32 %v459, %v651
          %v684 = vmul.f32 %v460, %v652
          %v685 = vmul.f32 %v461, %v653
          %v686 = vmul.f32 %v462, %v654
          %v687 = vmul.f32 %v463, %v655
          %v688 = vmul.f32 %v464, %v656
          %v689 = vmul.f32 %v465, %v657
          %v690 = vmul.f32 %v466, %v658
          %v691 = vmul.f32 %v467, %v659
          %v692 = vmul.f32 %v468, %v660
          %v693 = vmul.f32 %v469, %v661
          %v695 = vlaneseq
          %v696 = vshrl.u32 %v695, 7
          %v697 = vsub.s32 0, %v696
          %v698 = vrot.slane %v339, %v697
          %v700 = vmul.f32 %v662, %v698
          %v701 = vmul.f32 %v663, %v698
          %v702 = vmul.f32 %v664, %v698
          %v703 = vmul.f32 %v665, %v698
          %v704 = vmul.f32 %v666, %v698
          %v705 = vmul.f32 %v667, %v698
          %v706 = vmul.f32 %v668, %v698
          %v707 = vmul.f32 %v669, %v698
          %v708 = vmul.f32 %v670, %v698
          %v709 = vmul.f32 %v671, %v698
          %v710 = vmul.f32 %v672, %v698
          %v711 = vmul.f32 %v673, %v698
          %v712 = vmul.f32 %v674, %v698
          %v713 = vmul.f32 %v675, %v698
          %v714 = vmul.f32 %v676, %v698
          %v715 = vmul.f32 %v677, %v698
          %v716 = vmul.f32 %v678, %v698
          %v717 = vmul.f32 %v679, %v698
          %v718 = vmul.f32 %v680, %v698
          %v719 = vmul.f32 %v681, %v698
          %v720 = vmul.f32 %v682, %v698
          %v721 = vmul.f32 %v683, %v698
          %v722 = vmul.f32 %v684, %v698
          %v723 = vmul.f32 %v685, %v698
          %v724 = vmul.f32 %v686, %v698
          %v725 = vmul.f32 %v687, %v698
          %v726 = vmul.f32 %v688, %v698
          %v727 = vmul.f32 %v689, %v698
          %v728 = vmul.f32 %v690, %v698
          %v729 = vmul.f32 %v691, %v698
          %v730 = vmul.f32 %v692, %v698
          %v731 = vmul.f32 %v693, %v698
          %v733 = vlaneseq
          %v734 = vshrl.u32 %v733, 7
          %v735 = vsub.s32 0, %v734
          %v736 = vrot.slane %v340, %v735
          %v738 = vadd.f32 %v700, %v736
          %v739 = vadd.f32 %v701, %v736
          %v740 = vadd.f32 %v702, %v736
          %v741 = vadd.f32 %v703, %v736
          %v742 = vadd.f32 %v704, %v736
          %v743 = vadd.f32 %v705, %v736
          %v744 = vadd.f32 %v706, %v736
          %v745 = vadd.f32 %v707, %v736
          %v746 = vadd.f32 %v708, %v736
          %v747 = vadd.f32 %v709, %v736
          %v748 = vadd.f32 %v710, %v736
          %v749 = vadd.f32 %v711, %v736
          %v750 = vadd.f32 %v712, %v736
          %v751 = vadd.f32 %v713, %v736
          %v752 = vadd.f32 %v714, %v736
          %v753 = vadd.f32 %v715, %v736
          %v754 = vadd.f32 %v716, %v736
          %v755 = vadd.f32 %v717, %v736
          %v756 = vadd.f32 %v718, %v736
          %v757 = vadd.f32 %v719, %v736
          %v758 = vadd.f32 %v720, %v736
          %v759 = vadd.f32 %v721, %v736
          %v760 = vadd.f32 %v722, %v736
          %v761 = vadd.f32 %v723, %v736
          %v762 = vadd.f32 %v724, %v736
          %v763 = vadd.f32 %v725, %v736
          %v764 = vadd.f32 %v726, %v736
          %v765 = vadd.f32 %v727, %v736
          %v766 = vadd.f32 %v728, %v736
          %v767 = vadd.f32 %v729, %v736
          %v768 = vadd.f32 %v730, %v736
          %v769 = vadd.f32 %v731, %v736
          %770 = vst [vmem:[#allocation2] sm:$0xff] %v738
          %771 = vst [vmem:[#allocation2 + $0x8] sm:$0xff] %v739
          %772 = vst [vmem:[#allocation2 + $0x10] sm:$0xff] %v740
          %773 = vst [vmem:[#allocation2 + $0x18] sm:$0xff] %v741
          %774 = vst [vmem:[#allocation2 + $0x20] sm:$0xff] %v742
          %775 = vst [vmem:[#allocation2 + $0x28] sm:$0xff] %v743
          %776 = vst [vmem:[#allocation2 + $0x30] sm:$0xff] %v744
          %777 = vst [vmem:[#allocation2 + $0x38] sm:$0xff] %v745
          %778 = vst [vmem:[#allocation2 + $0x40] sm:$0xff] %v746
          %779 = vst [vmem:[#allocation2 + $0x48] sm:$0xff] %v747
          %780 = vst [vmem:[#allocation2 + $0x50] sm:$0xff] %v748
          %781 = vst [vmem:[#allocation2 + $0x58] sm:$0xff] %v749
          %782 = vst [vmem:[#allocation2 + $0x60] sm:$0xff] %v750
          %783 = vst [vmem:[#allocation2 + $0x68] sm:$0xff] %v751
          %784 = vst [vmem:[#allocation2 + $0x70] sm:$0xff] %v752
          %785 = vst [vmem:[#allocation2 + $0x78] sm:$0xff] %v753
          %786 = vst [vmem:[#allocation2 + $0x80] sm:$0xff] %v754
          %787 = vst [vmem:[#allocation2 + $0x88] sm:$0xff] %v755
          %788 = vst [vmem:[#allocation2 + $0x90] sm:$0xff] %v756
          %789 = vst [vmem:[#allocation2 + $0x98] sm:$0xff] %v757
          %790 = vst [vmem:[#allocation2 + $0xa0] sm:$0xff] %v758
          %791 = vst [vmem:[#allocation2 + $0xa8] sm:$0xff] %v759
          %792 = vst [vmem:[#allocation2 + $0xb0] sm:$0xff] %v760
          %793 = vst [vmem:[#allocation2 + $0xb8] sm:$0xff] %v761
          %794 = vst [vmem:[#allocation2 + $0xc0] sm:$0xff] %v762
          %795 = vst [vmem:[#allocation2 + $0xc8] sm:$0xff] %v763
          %796 = vst [vmem:[#allocation2 + $0xd0] sm:$0xff] %v764
          %797 = vst [vmem:[#allocation2 + $0xd8] sm:$0xff] %v765
          %798 = vst [vmem:[#allocation2 + $0xe0] sm:$0xff] %v766
          %799 = vst [vmem:[#allocation2 + $0xe8] sm:$0xff] %v767
          %800 = vst [vmem:[#allocation2 + $0xf0] sm:$0xff] %v768
          %801 = vst [vmem:[#allocation2 + $0xf8] sm:$0xff] %v769
        $region52: #{tpu_custom_call.1} parent=39 // pred_fallthru
          _
        %v802 = vld [vmem:[#allocation2] sm:$0xff]
        %v803 = vld [vmem:[#allocation2 + $0x8] sm:$0xff]
        %v804 = vld [vmem:[#allocation2 + $0x10] sm:$0xff]
        %v805 = vld [vmem:[#allocation2 + $0x18] sm:$0xff]
        %v806 = vld [vmem:[#allocation2 + $0x20] sm:$0xff]
        %v807 = vld [vmem:[#allocation2 + $0x28] sm:$0xff]
        %v808 = vld [vmem:[#allocation2 + $0x30] sm:$0xff]
        %v809 = vld [vmem:[#allocation2 + $0x38] sm:$0xff]
        %v810 = vld [vmem:[#allocation2 + $0x40] sm:$0xff]
        %v811 = vld [vmem:[#allocation2 + $0x48] sm:$0xff]
        %v812 = vld [vmem:[#allocation2 + $0x50] sm:$0xff]
        %v813 = vld [vmem:[#allocation2 + $0x58] sm:$0xff]
        %v814 = vld [vmem:[#allocation2 + $0x60] sm:$0xff]
        %v815 = vld [vmem:[#allocation2 + $0x68] sm:$0xff]
        %v816 = vld [vmem:[#allocation2 + $0x70] sm:$0xff]
        %v817 = vld [vmem:[#allocation2 + $0x78] sm:$0xff]
        %v818 = vld [vmem:[#allocation2 + $0x80] sm:$0xff]
        %v819 = vld [vmem:[#allocation2 + $0x88] sm:$0xff]
        %v820 = vld [vmem:[#allocation2 + $0x90] sm:$0xff]
        %v821 = vld [vmem:[#allocation2 + $0x98] sm:$0xff]
        %v822 = vld [vmem:[#allocation2 + $0xa0] sm:$0xff]
        %v823 = vld [vmem:[#allocation2 + $0xa8] sm:$0xff]
        %v824 = vld [vmem:[#allocation2 + $0xb0] sm:$0xff]
        %v825 = vld [vmem:[#allocation2 + $0xb8] sm:$0xff]
        %v826 = vld [vmem:[#allocation2 + $0xc0] sm:$0xff]
        %v827 = vld [vmem:[#allocation2 + $0xc8] sm:$0xff]
        %v828 = vld [vmem:[#allocation2 + $0xd0] sm:$0xff]
        %v829 = vld [vmem:[#allocation2 + $0xd8] sm:$0xff]
        %v830 = vld [vmem:[#allocation2 + $0xe0] sm:$0xff]
        %v831 = vld [vmem:[#allocation2 + $0xe8] sm:$0xff]
        %v832 = vld [vmem:[#allocation2 + $0xf0] sm:$0xff]
        %v833 = vld [vmem:[#allocation2 + $0xf8] sm:$0xff]
        %v834 = vld [vmem:[#allocation6] sm:$0xff]
        %v835 = vld [vmem:[#allocation6 + $0x8] sm:$0xff]
        %v836 = vld [vmem:[#allocation6 + $0x10] sm:$0xff]
        %v837 = vld [vmem:[#allocation6 + $0x18] sm:$0xff]
        %v838 = vld [vmem:[#allocation6 + $0x20] sm:$0xff]
        %v839 = vld [vmem:[#allocation6 + $0x28] sm:$0xff]
        %v840 = vld [vmem:[#allocation6 + $0x30] sm:$0xff]
        %v841 = vld [vmem:[#allocation6 + $0x38] sm:$0xff]
        %v842 = vld [vmem:[#allocation6 + $0x40] sm:$0xff]
        %v843 = vld [vmem:[#allocation6 + $0x48] sm:$0xff]
        %v844 = vld [vmem:[#allocation6 + $0x50] sm:$0xff]
        %v845 = vld [vmem:[#allocation6 + $0x58] sm:$0xff]
        %v846 = vld [vmem:[#allocation6 + $0x60] sm:$0xff]
        %v847 = vld [vmem:[#allocation6 + $0x68] sm:$0xff]
        %v848 = vld [vmem:[#allocation6 + $0x70] sm:$0xff]
        %v849 = vld [vmem:[#allocation6 + $0x78] sm:$0xff]
        %v850 = vld [vmem:[#allocation6 + $0x80] sm:$0xff]
        %v851 = vld [vmem:[#allocation6 + $0x88] sm:$0xff]
        %v852 = vld [vmem:[#allocation6 + $0x90] sm:$0xff]
        %v853 = vld [vmem:[#allocation6 + $0x98] sm:$0xff]
        %v854 = vld [vmem:[#allocation6 + $0xa0] sm:$0xff]
        %v855 = vld [vmem:[#allocation6 + $0xa8] sm:$0xff]
        %v856 = vld [vmem:[#allocation6 + $0xb0] sm:$0xff]
        %v857 = vld [vmem:[#allocation6 + $0xb8] sm:$0xff]
        %v858 = vld [vmem:[#allocation6 + $0xc0] sm:$0xff]
        %v859 = vld [vmem:[#allocation6 + $0xc8] sm:$0xff]
        %v860 = vld [vmem:[#allocation6 + $0xd0] sm:$0xff]
        %v861 = vld [vmem:[#allocation6 + $0xd8] sm:$0xff]
        %v862 = vld [vmem:[#allocation6 + $0xe0] sm:$0xff]
        %v863 = vld [vmem:[#allocation6 + $0xe8] sm:$0xff]
        %v864 = vld [vmem:[#allocation6 + $0xf0] sm:$0xff]
        %v865 = vld [vmem:[#allocation6 + $0xf8] sm:$0xff]
        %v866 = vld [vmem:[#allocation6 + $0x100] sm:$0xff]
        %v867 = vld [vmem:[#allocation6 + $0x108] sm:$0xff]
        %v868 = vld [vmem:[#allocation6 + $0x110] sm:$0xff]
        %v869 = vld [vmem:[#allocation6 + $0x118] sm:$0xff]
        %v870 = vld [vmem:[#allocation6 + $0x120] sm:$0xff]
        %v871 = vld [vmem:[#allocation6 + $0x128] sm:$0xff]
        %v872 = vld [vmem:[#allocation6 + $0x130] sm:$0xff]
        %v873 = vld [vmem:[#allocation6 + $0x138] sm:$0xff]
        %v874 = vld [vmem:[#allocation6 + $0x140] sm:$0xff]
        %v875 = vld [vmem:[#allocation6 + $0x148] sm:$0xff]
        %v876 = vld [vmem:[#allocation6 + $0x150] sm:$0xff]
        %v877 = vld [vmem:[#allocation6 + $0x158] sm:$0xff]
        %v878 = vld [vmem:[#allocation6 + $0x160] sm:$0xff]
        %v879 = vld [vmem:[#allocation6 + $0x168] sm:$0xff]
        %v880 = vld [vmem:[#allocation6 + $0x170] sm:$0xff]
        %v881 = vld [vmem:[#allocation6 + $0x178] sm:$0xff]
        %v882 = vld [vmem:[%s299] sm:$0x7]
        %v884 = vlaneseq
        %v885 = vshrl.u32 %v884, 7
        %v886 = vsub.s32 0, %v885
        %v887 = vrot.slane %v882, %v886
        %v888 = vlaneseq
        %v889 = vshrl.u32 %v888, 7
        %v890 = vsub.s32 1, %v889
        %v891 = vrot.slane %v882, %v890
        %v892 = vlaneseq
        %v893 = vshrl.u32 %v892, 7
        %v894 = vsub.s32 2, %v893
        %v895 = vrot.slane %v882, %v894
        %899 = vmatprep.subr.mxu0 %v835
        %900 = vmatpush1.msra.mxu0 %v834
        %901 = vmatprep.subr.mxu0 %v838
        %902 = vmatpush1.msra.mxu0 %v837
        %903 = vmatprep.subr.mxu0 %v841
        %904 = vmatpush1.msra.mxu0 %v840
        %905 = vmatprep.subr.mxu0 %v844
        %906 = vmatpush1.msra.mxu0 %v843
        %907 = vmatprep.subr.mxu0 %v847
        %908 = vmatpush1.msra.mxu0 %v846
        %909 = vmatprep.subr.mxu0 %v850
        %910 = vmatpush1.msra.mxu0 %v849
        %911 = vmatprep.subr.mxu0 %v853
        %912 = vmatpush1.msra.mxu0 %v852
        %913 = vmatprep.subr.mxu0 %v856
        %914 = vmatpush1.msra.mxu0 %v855
        %915 = vmatprep.subr.mxu0 %v859
        %916 = vmatpush1.msra.mxu0 %v858
        %917 = vmatprep.subr.mxu0 %v862
        %918 = vmatpush1.msra.mxu0 %v861
        %919 = vmatprep.subr.mxu0 %v865
        %920 = vmatpush1.msra.mxu0 %v864
        %921 = vmatprep.subr.mxu0 %v868
        %922 = vmatpush1.msra.mxu0 %v867
        %923 = vmatprep.subr.mxu0 %v871
        %924 = vmatpush1.msra.mxu0 %v870
        %925 = vmatprep.subr.mxu0 %v874
        %926 = vmatpush1.msra.mxu0 %v873
        %927 = vmatprep.subr.mxu0 %v877
        %928 = vmatpush1.msra.mxu0 %v876
        %929 = vmatprep.subr.mxu0 %v880
        %930 = vmatpush1.msra.mxu0 %v879
        %931 = vmatprep.subr.mxu0 0.0
        %932 = vmatpush1.msra.mxu0 0.0
        %933 = vmatprep.subr.mxu0 0.0
        %934 = vmatpush1.msra.mxu0 0.0
        %935 = vmatprep.subr.mxu0 0.0
        %936 = vmatpush1.msra.mxu0 0.0
        %937 = vmatprep.subr.mxu0 0.0
        %938 = vmatpush1.msra.mxu0 0.0
        %939 = vmatprep.subr.mxu0 0.0
        %940 = vmatpush1.msra.mxu0 0.0
        %941 = vmatprep.subr.mxu0 0.0
        %942 = vmatpush1.msra.mxu0 0.0
        %943 = vmatprep.subr.mxu0 0.0
        %944 = vmatpush1.msra.mxu0 0.0
        %945 = vmatprep.subr.mxu0 0.0
        %946 = vmatpush1.msra.mxu0 0.0
        %947 = vmatprep.subr.mxu0 0.0
        %948 = vmatpush1.msra.mxu0 0.0
        %949 = vmatprep.subr.mxu0 0.0
        %950 = vmatpush1.msra.mxu0 0.0
        %951 = vmatprep.subr.mxu0 0.0
        %952 = vmatpush1.msra.mxu0 0.0
        %953 = vmatprep.subr.mxu0 0.0
        %954 = vmatpush1.msra.mxu0 0.0
        %955 = vmatprep.subr.mxu0 0.0
        %956 = vmatpush1.msra.mxu0 0.0
        %957 = vmatprep.subr.mxu0 0.0
        %958 = vmatpush1.msra.mxu0 0.0
        %959 = vmatprep.subr.mxu0 0.0
        %960 = vmatpush1.msra.mxu0 0.0
        %961 = vmatprep.subr.mxu0 0.0
        %962 = vmatpush1.msra.mxu0 0.0
        %963 = vmatprep.mubr.f32.mxu0 0.0
        %964 = vmatmul.mubr.f32.gmra.mrb[0].mxu0 %v802
        %v965 = vpop.f32.mrb[0].mxu0
        %v966 = vadd.f32 %v887, %v965
        %v967 = vpop.f32.mrb[0].mxu0
        %v968 = vadd.f32 %v891, %v967
        %969 = vmatprep.mubr.f32.mxu0 0.0
        %970 = vmatmul.mubr.f32.gmra.mrb[0].mxu0 %v803
        %v971 = vpop.f32.mrb[0].mxu0
        %v972 = vadd.f32 %v887, %v971
        %v973 = vpop.f32.mrb[0].mxu0
        %v974 = vadd.f32 %v891, %v973
        %975 = vmatprep.mubr.f32.mxu0 0.0
        %976 = vmatmul.mubr.f32.gmra.mrb[0].mxu0 %v804
        %v977 = vpop.f32.mrb[0].mxu0
        %v978 = vadd.f32 %v887, %v977
        %v979 = vpop.f32.mrb[0].mxu0
        %v980 = vadd.f32 %v891, %v979
        %981 = vmatprep.mubr.f32.mxu0 0.0
        %982 = vmatmul.mubr.f32.gmra.mrb[0].mxu0 %v805
        %v983 = vpop.f32.mrb[0].mxu0
        %v984 = vadd.f32 %v887, %v983
        %v985 = vpop.f32.mrb[0].mxu0
        %v986 = vadd.f32 %v891, %v985
        %987 = vmatprep.mubr.f32.mxu0 0.0
        %988 = vmatmul.mubr.f32.gmra.mrb[0].mxu0 %v806
        %v989 = vpop.f32.mrb[0].mxu0
        %v990 = vadd.f32 %v887, %v989
        %v991 = vpop.f32.mrb[0].mxu0
        %v992 = vadd.f32 %v891, %v991
        %993 = vmatprep.mubr.f32.mxu0 0.0
        %994 = vmatmul.mubr.f32.gmra.mrb[0].mxu0 %v807
        %v995 = vpop.f32.mrb[0].mxu0
        %v996 = vadd.f32 %v887, %v995
        %v997 = vpop.f32.mrb[0].mxu0
        %v998 = vadd.f32 %v891, %v997
        %999 = vmatprep.mubr.f32.mxu0 0.0
        %1000 = vmatmul.mubr.f32.gmra.mrb[0].mxu0 %v808
        %v1001 = vpop.f32.mrb[0].mxu0
        %v1002 = vadd.f32 %v887, %v1001
        %v1003 = vpop.f32.mrb[0].mxu0
        %v1004 = vadd.f32 %v891, %v1003
        %1005 = vmatprep.mubr.f32.mxu0 0.0
        %1006 = vmatmul.mubr.f32.gmra.mrb[0].mxu0 %v809
        %v1007 = vpop.f32.mrb[0].mxu0
        %v1008 = vadd.f32 %v887, %v1007
        %v1009 = vpop.f32.mrb[0].mxu0
        %v1010 = vadd.f32 %v891, %v1009
        %1011 = vmatprep.mubr.f32.mxu0 0.0
        %1012 = vmatmul.mubr.f32.gmra.mrb[0].mxu0 %v810
        %v1013 = vpop.f32.mrb[0].mxu0
        %v1014 = vadd.f32 %v887, %v1013
        %v1015 = vpop.f32.mrb[0].mxu0
        %v1016 = vadd.f32 %v891, %v1015
        %1017 = vmatprep.mubr.f32.mxu0 0.0
        %1018 = vmatmul.mubr.f32.gmra.mrb[0].mxu0 %v811
        %v1019 = vpop.f32.mrb[0].mxu0
        %v1020 = vadd.f32 %v887, %v1019
        %v1021 = vpop.f32.mrb[0].mxu0
        %v1022 = vadd.f32 %v891, %v1021
        %1023 = vmatprep.mubr.f32.mxu0 0.0
        %1024 = vmatmul.mubr.f32.gmra.mrb[0].mxu0 %v812
        %v1025 = vpop.f32.mrb[0].mxu0
        %v1026 = vadd.f32 %v887, %v1025
        %v1027 = vpop.f32.mrb[0].mxu0
        %v1028 = vadd.f32 %v891, %v1027
        %1029 = vmatprep.mubr.f32.mxu0 0.0
        %1030 = vmatmul.mubr.f32.gmra.mrb[0].mxu0 %v813
        %v1031 = vpop.f32.mrb[0].mxu0
        %v1032 = vadd.f32 %v887, %v1031
        %v1033 = vpop.f32.mrb[0].mxu0
        %v1034 = vadd.f32 %v891, %v1033
        %1035 = vmatprep.mubr.f32.mxu0 0.0
        %1036 = vmatmul.mubr.f32.gmra.mrb[0].mxu0 %v814
        %v1037 = vpop.f32.mrb[0].mxu0
        %v1038 = vadd.f32 %v887, %v1037
        %v1039 = vpop.f32.mrb[0].mxu0
        %v1040 = vadd.f32 %v891, %v1039
        %1041 = vmatprep.mubr.f32.mxu0 0.0
        %1042 = vmatmul.mubr.f32.gmra.mrb[0].mxu0 %v815
        %v1043 = vpop.f32.mrb[0].mxu0
        %v1044 = vadd.f32 %v887, %v1043
        %v1045 = vpop.f32.mrb[0].mxu0
        %v1046 = vadd.f32 %v891, %v1045
        %1047 = vmatprep.mubr.f32.mxu0 0.0
        %1048 = vmatmul.mubr.f32.gmra.mrb[0].mxu0 %v816
        %v1049 = vpop.f32.mrb[0].mxu0
        %v1050 = vadd.f32 %v887, %v1049
        %v1051 = vpop.f32.mrb[0].mxu0
        %v1052 = vadd.f32 %v891, %v1051
        %1053 = vmatprep.mubr.f32.mxu0 0.0
        %1054 = vmatmul.mubr.f32.gmra.mrb[0].mxu0 %v817
        %v1055 = vpop.f32.mrb[0].mxu0
        %v1056 = vadd.f32 %v887, %v1055
        %v1057 = vpop.f32.mrb[0].mxu0
        %v1058 = vadd.f32 %v891, %v1057
        %1059 = vmatprep.mubr.f32.mxu0 0.0
        %1060 = vmatmul.mubr.f32.gmra.mrb[0].mxu0 %v818
        %v1061 = vpop.f32.mrb[0].mxu0
        %v1062 = vadd.f32 %v887, %v1061
        %v1063 = vpop.f32.mrb[0].mxu0
        %v1064 = vadd.f32 %v891, %v1063
        %1065 = vmatprep.mubr.f32.mxu0 0.0
        %1066 = vmatmul.mubr.f32.gmra.mrb[0].mxu0 %v819
        %v1067 = vpop.f32.mrb[0].mxu0
        %v1068 = vadd.f32 %v887, %v1067
        %v1069 = vpop.f32.mrb[0].mxu0
        %v1070 = vadd.f32 %v891, %v1069
        %1071 = vmatprep.mubr.f32.mxu0 0.0
        %1072 = vmatmul.mubr.f32.gmra.mrb[0].mxu0 %v820
        %v1073 = vpop.f32.mrb[0].mxu0
        %v1074 = vadd.f32 %v887, %v1073
        %v1075 = vpop.f32.mrb[0].mxu0
        %v1076 = vadd.f32 %v891, %v1075
        %1077 = vmatprep.mubr.f32.mxu0 0.0
        %1078 = vmatmul.mubr.f32.gmra.mrb[0].mxu0 %v821
        %v1079 = vpop.f32.mrb[0].mxu0
        %v1080 = vadd.f32 %v887, %v1079
        %v1081 = vpop.f32.mrb[0].mxu0
        %v1082 = vadd.f32 %v891, %v1081
        %1083 = vmatprep.mubr.f32.mxu0 0.0
        %1084 = vmatmul.mubr.f32.gmra.mrb[0].mxu0 %v822
        %v1085 = vpop.f32.mrb[0].mxu0
        %v1086 = vadd.f32 %v887, %v1085
        %v1087 = vpop.f32.mrb[0].mxu0
        %v1088 = vadd.f32 %v891, %v1087
        %1089 = vmatprep.mubr.f32.mxu0 0.0
        %1090 = vmatmul.mubr.f32.gmra.mrb[0].mxu0 %v823
        %v1091 = vpop.f32.mrb[0].mxu0
        %v1092 = vadd.f32 %v887, %v1091
        %v1093 = vpop.f32.mrb[0].mxu0
        %v1094 = vadd.f32 %v891, %v1093
        %1095 = vmatprep.mubr.f32.mxu0 0.0
        %1096 = vmatmul.mubr.f32.gmra.mrb[0].mxu0 %v824
        %v1097 = vpop.f32.mrb[0].mxu0
        %v1098 = vadd.f32 %v887, %v1097
        %v1099 = vpop.f32.mrb[0].mxu0
        %v1100 = vadd.f32 %v891, %v1099
        %1101 = vmatprep.mubr.f32.mxu0 0.0
        %1102 = vmatmul.mubr.f32.gmra.mrb[0].mxu0 %v825
        %v1103 = vpop.f32.mrb[0].mxu0
        %v1104 = vadd.f32 %v887, %v1103
        %v1105 = vpop.f32.mrb[0].mxu0
        %v1106 = vadd.f32 %v891, %v1105
        %1107 = vmatprep.mubr.f32.mxu0 0.0
        %1108 = vmatmul.mubr.f32.gmra.mrb[0].mxu0 %v826
        %v1109 = vpop.f32.mrb[0].mxu0
        %v1110 = vadd.f32 %v887, %v1109
        %v1111 = vpop.f32.mrb[0].mxu0
        %v1112 = vadd.f32 %v891, %v1111
        %1113 = vmatprep.mubr.f32.mxu0 0.0
        %1114 = vmatmul.mubr.f32.gmra.mrb[0].mxu0 %v827
        %v1115 = vpop.f32.mrb[0].mxu0
        %v1116 = vadd.f32 %v887, %v1115
        %v1117 = vpop.f32.mrb[0].mxu0
        %v1118 = vadd.f32 %v891, %v1117
        %1119 = vmatprep.mubr.f32.mxu0 0.0
        %1120 = vmatmul.mubr.f32.gmra.mrb[0].mxu0 %v828
        %v1121 = vpop.f32.mrb[0].mxu0
        %v1122 = vadd.f32 %v887, %v1121
        %v1123 = vpop.f32.mrb[0].mxu0
        %v1124 = vadd.f32 %v891, %v1123
        %1125 = vmatprep.mubr.f32.mxu0 0.0
        %1126 = vmatmul.mubr.f32.gmra.mrb[0].mxu0 %v829
        %v1127 = vpop.f32.mrb[0].mxu0
        %v1128 = vadd.f32 %v887, %v1127
        %v1129 = vpop.f32.mrb[0].mxu0
        %v1130 = vadd.f32 %v891, %v1129
        %1131 = vmatprep.mubr.f32.mxu0 0.0
        %1132 = vmatmul.mubr.f32.gmra.mrb[0].mxu0 %v830
        %v1133 = vpop.f32.mrb[0].mxu0
        %v1134 = vadd.f32 %v887, %v1133
        %v1135 = vpop.f32.mrb[0].mxu0
        %v1136 = vadd.f32 %v891, %v1135
        %1137 = vmatprep.mubr.f32.mxu0 0.0
        %1138 = vmatmul.mubr.f32.gmra.mrb[0].mxu0 %v831
        %v1139 = vpop.f32.mrb[0].mxu0
        %v1140 = vadd.f32 %v887, %v1139
        %v1141 = vpop.f32.mrb[0].mxu0
        %v1142 = vadd.f32 %v891, %v1141
        %1143 = vmatprep.mubr.f32.mxu0 0.0
        %1144 = vmatmul.mubr.f32.gmra.mrb[0].mxu0 %v832
        %v1145 = vpop.f32.mrb[0].mxu0
        %v1146 = vadd.f32 %v887, %v1145
        %v1147 = vpop.f32.mrb[0].mxu0
        %v1148 = vadd.f32 %v891, %v1147
        %1149 = vmatprep.mubr.f32.mxu0 0.0
        %1150 = vmatmul.mubr.f32.gmra.mrb[0].mxu0 %v833
        %v1151 = vpop.f32.mrb[0].mxu0
        %v1152 = vadd.f32 %v887, %v1151
        %v1153 = vpop.f32.mrb[0].mxu0
        %v1154 = vadd.f32 %v891, %v1153
        %1155 = vdwg.mxu0
        %1156 = vmatprep.subr.mxu0 0.0
        %1157 = vmatpush1.msra.mxu0 %v836
        %1158 = vmatprep.subr.mxu0 0.0
        %1159 = vmatpush1.msra.mxu0 %v839
        %1160 = vmatprep.subr.mxu0 0.0
        %1161 = vmatpush1.msra.mxu0 %v842
        %1162 = vmatprep.subr.mxu0 0.0
        %1163 = vmatpush1.msra.mxu0 %v845
        %1164 = vmatprep.subr.mxu0 0.0
        %1165 = vmatpush1.msra.mxu0 %v848
        %1166 = vmatprep.subr.mxu0 0.0
        %1167 = vmatpush1.msra.mxu0 %v851
        %1168 = vmatprep.subr.mxu0 0.0
        %1169 = vmatpush1.msra.mxu0 %v854
        %1170 = vmatprep.subr.mxu0 0.0
        %1171 = vmatpush1.msra.mxu0 %v857
        %1172 = vmatprep.subr.mxu0 0.0
        %1173 = vmatpush1.msra.mxu0 %v860
        %1174 = vmatprep.subr.mxu0 0.0
        %1175 = vmatpush1.msra.mxu0 %v863
        %1176 = vmatprep.subr.mxu0 0.0
        %1177 = vmatpush1.msra.mxu0 %v866
        %1178 = vmatprep.subr.mxu0 0.0
        %1179 = vmatpush1.msra.mxu0 %v869
        %1180 = vmatprep.subr.mxu0 0.0
        %1181 = vmatpush1.msra.mxu0 %v872
        %1182 = vmatprep.subr.mxu0 0.0
        %1183 = vmatpush1.msra.mxu0 %v875
        %1184 = vmatprep.subr.mxu0 0.0
        %1185 = vmatpush1.msra.mxu0 %v878
        %1186 = vmatprep.subr.mxu0 0.0
        %1187 = vmatpush1.msra.mxu0 %v881
        %1188 = vmatprep.subr.mxu0 0.0
        %1189 = vmatpush1.msra.mxu0 0.0
        %1190 = vmatprep.subr.mxu0 0.0
        %1191 = vmatpush1.msra.mxu0 0.0
        %1192 = vmatprep.subr.mxu0 0.0
        %1193 = vmatpush1.msra.mxu0 0.0
        %1194 = vmatprep.subr.mxu0 0.0
        %1195 = vmatpush1.msra.mxu0 0.0
        %1196 = vmatprep.subr.mxu0 0.0
        %1197 = vmatpush1.msra.mxu0 0.0
        %1198 = vmatprep.subr.mxu0 0.0
        %1199 = vmatpush1.msra.mxu0 0.0
        %1200 = vmatprep.subr.mxu0 0.0
        %1201 = vmatpush1.msra.mxu0 0.0
        %1202 = vmatprep.subr.mxu0 0.0
        %1203 = vmatpush1.msra.mxu0 0.0
        %1204 = vmatprep.subr.mxu0 0.0
        %1205 = vmatpush1.msra.mxu0 0.0
        %1206 = vmatprep.subr.mxu0 0.0
        %1207 = vmatpush1.msra.mxu0 0.0
        %1208 = vmatprep.subr.mxu0 0.0
        %1209 = vmatpush1.msra.mxu0 0.0
        %1210 = vmatprep.subr.mxu0 0.0
        %1211 = vmatpush1.msra.mxu0 0.0
        %1212 = vmatprep.subr.mxu0 0.0
        %1213 = vmatpush1.msra.mxu0 0.0
        %1214 = vmatprep.subr.mxu0 0.0
        %1215 = vmatpush1.msra.mxu0 0.0
        %1216 = vmatprep.subr.mxu0 0.0
        %1217 = vmatpush1.msra.mxu0 0.0
        %1218 = vmatprep.subr.mxu0 0.0
        %1219 = vmatpush1.msra.mxu0 0.0
        %1220 = vmatprep.mubr.f32.mxu0 0.0
        %1221 = vmatmul.mubr.f32.gmra.mrb[0].mxu0 %v802
        %v1222 = vpop.f32.mrb[0].mxu0
        %v1223 = vadd.f32 %v895, %v1222
        %v1224 = vpop.f32.mrb[0].mxu0
        %1225 = vmatprep.mubr.f32.mxu0 0.0
        %1226 = vmatmul.mubr.f32.gmra.mrb[0].mxu0 %v803
        %v1227 = vpop.f32.mrb[0].mxu0
        %v1228 = vadd.f32 %v895, %v1227
        %v1229 = vpop.f32.mrb[0].mxu0
        %1230 = vmatprep.mubr.f32.mxu0 0.0
        %1231 = vmatmul.mubr.f32.gmra.mrb[0].mxu0 %v804
        %v1232 = vpop.f32.mrb[0].mxu0
        %v1233 = vadd.f32 %v895, %v1232
        %v1234 = vpop.f32.mrb[0].mxu0
        %1235 = vmatprep.mubr.f32.mxu0 0.0
        %1236 = vmatmul.mubr.f32.gmra.mrb[0].mxu0 %v805
        %v1237 = vpop.f32.mrb[0].mxu0
        %v1238 = vadd.f32 %v895, %v1237
        %v1239 = vpop.f32.mrb[0].mxu0
        %1240 = vmatprep.mubr.f32.mxu0 0.0
        %1241 = vmatmul.mubr.f32.gmra.mrb[0].mxu0 %v806
        %v1242 = vpop.f32.mrb[0].mxu0
        %v1243 = vadd.f32 %v895, %v1242
        %v1244 = vpop.f32.mrb[0].mxu0
        %1245 = vmatprep.mubr.f32.mxu0 0.0
        %1246 = vmatmul.mubr.f32.gmra.mrb[0].mxu0 %v807
        %v1247 = vpop.f32.mrb[0].mxu0
        %v1248 = vadd.f32 %v895, %v1247
        %v1249 = vpop.f32.mrb[0].mxu0
        %1250 = vmatprep.mubr.f32.mxu0 0.0
        %1251 = vmatmul.mubr.f32.gmra.mrb[0].mxu0 %v808
        %v1252 = vpop.f32.mrb[0].mxu0
        %v1253 = vadd.f32 %v895, %v1252
        %v1254 = vpop.f32.mrb[0].mxu0
        %1255 = vmatprep.mubr.f32.mxu0 0.0
        %1256 = vmatmul.mubr.f32.gmra.mrb[0].mxu0 %v809
        %v1257 = vpop.f32.mrb[0].mxu0
        %v1258 = vadd.f32 %v895, %v1257
        %v1259 = vpop.f32.mrb[0].mxu0
        %1260 = vmatprep.mubr.f32.mxu0 0.0
        %1261 = vmatmul.mubr.f32.gmra.mrb[0].mxu0 %v810
        %v1262 = vpop.f32.mrb[0].mxu0
        %v1263 = vadd.f32 %v895, %v1262
        %v1264 = vpop.f32.mrb[0].mxu0
        %1265 = vmatprep.mubr.f32.mxu0 0.0
        %1266 = vmatmul.mubr.f32.gmra.mrb[0].mxu0 %v811
        %v1267 = vpop.f32.mrb[0].mxu0
        %v1268 = vadd.f32 %v895, %v1267
        %v1269 = vpop.f32.mrb[0].mxu0
        %1270 = vmatprep.mubr.f32.mxu0 0.0
        %1271 = vmatmul.mubr.f32.gmra.mrb[0].mxu0 %v812
        %v1272 = vpop.f32.mrb[0].mxu0
        %v1273 = vadd.f32 %v895, %v1272
        %v1274 = vpop.f32.mrb[0].mxu0
        %1275 = vmatprep.mubr.f32.mxu0 0.0
        %1276 = vmatmul.mubr.f32.gmra.mrb[0].mxu0 %v813
        %v1277 = vpop.f32.mrb[0].mxu0
        %v1278 = vadd.f32 %v895, %v1277
        %v1279 = vpop.f32.mrb[0].mxu0
        %1280 = vmatprep.mubr.f32.mxu0 0.0
        %1281 = vmatmul.mubr.f32.gmra.mrb[0].mxu0 %v814
        %v1282 = vpop.f32.mrb[0].mxu0
        %v1283 = vadd.f32 %v895, %v1282
        %v1284 = vpop.f32.mrb[0].mxu0
        %1285 = vmatprep.mubr.f32.mxu0 0.0
        %1286 = vmatmul.mubr.f32.gmra.mrb[0].mxu0 %v815
        %v1287 = vpop.f32.mrb[0].mxu0
        %v1288 = vadd.f32 %v895, %v1287
        %v1289 = vpop.f32.mrb[0].mxu0
        %1290 = vmatprep.mubr.f32.mxu0 0.0
        %1291 = vmatmul.mubr.f32.gmra.mrb[0].mxu0 %v816
        %v1292 = vpop.f32.mrb[0].mxu0
        %v1293 = vadd.f32 %v895, %v1292
        %v1294 = vpop.f32.mrb[0].mxu0
        %1295 = vmatprep.mubr.f32.mxu0 0.0
        %1296 = vmatmul.mubr.f32.gmra.mrb[0].mxu0 %v817
        %v1297 = vpop.f32.mrb[0].mxu0
        %v1298 = vadd.f32 %v895, %v1297
        %v1299 = vpop.f32.mrb[0].mxu0
        %1300 = vmatprep.mubr.f32.mxu0 0.0
        %1301 = vmatmul.mubr.f32.gmra.mrb[0].mxu0 %v818
        %v1302 = vpop.f32.mrb[0].mxu0
        %v1303 = vadd.f32 %v895, %v1302
        %v1304 = vpop.f32.mrb[0].mxu0
        %1305 = vmatprep.mubr.f32.mxu0 0.0
        %1306 = vmatmul.mubr.f32.gmra.mrb[0].mxu0 %v819
        %v1307 = vpop.f32.mrb[0].mxu0
        %v1308 = vadd.f32 %v895, %v1307
        %v1309 = vpop.f32.mrb[0].mxu0
        %1310 = vmatprep.mubr.f32.mxu0 0.0
        %1311 = vmatmul.mubr.f32.gmra.mrb[0].mxu0 %v820
        %v1312 = vpop.f32.mrb[0].mxu0
        %v1313 = vadd.f32 %v895, %v1312
        %v1314 = vpop.f32.mrb[0].mxu0
        %1315 = vmatprep.mubr.f32.mxu0 0.0
        %1316 = vmatmul.mubr.f32.gmra.mrb[0].mxu0 %v821
        %v1317 = vpop.f32.mrb[0].mxu0
        %v1318 = vadd.f32 %v895, %v1317
        %v1319 = vpop.f32.mrb[0].mxu0
        %1320 = vmatprep.mubr.f32.mxu0 0.0
        %1321 = vmatmul.mubr.f32.gmra.mrb[0].mxu0 %v822
        %v1322 = vpop.f32.mrb[0].mxu0
        %v1323 = vadd.f32 %v895, %v1322
        %v1324 = vpop.f32.mrb[0].mxu0
        %1325 = vmatprep.mubr.f32.mxu0 0.0
        %1326 = vmatmul.mubr.f32.gmra.mrb[0].mxu0 %v823
        %v1327 = vpop.f32.mrb[0].mxu0
        %v1328 = vadd.f32 %v895, %v1327
        %v1329 = vpop.f32.mrb[0].mxu0
        %1330 = vmatprep.mubr.f32.mxu0 0.0
        %1331 = vmatmul.mubr.f32.gmra.mrb[0].mxu0 %v824
        %v1332 = vpop.f32.mrb[0].mxu0
        %v1333 = vadd.f32 %v895, %v1332
        %v1334 = vpop.f32.mrb[0].mxu0
        %1335 = vmatprep.mubr.f32.mxu0 0.0
        %1336 = vmatmul.mubr.f32.gmra.mrb[0].mxu0 %v825
        %v1337 = vpop.f32.mrb[0].mxu0
        %v1338 = vadd.f32 %v895, %v1337
        %v1339 = vpop.f32.mrb[0].mxu0
        %1340 = vmatprep.mubr.f32.mxu0 0.0
        %1341 = vmatmul.mubr.f32.gmra.mrb[0].mxu0 %v826
        %v1342 = vpop.f32.mrb[0].mxu0
        %v1343 = vadd.f32 %v895, %v1342
        %v1344 = vpop.f32.mrb[0].mxu0
        %1345 = vmatprep.mubr.f32.mxu0 0.0
        %1346 = vmatmul.mubr.f32.gmra.mrb[0].mxu0 %v827
        %v1347 = vpop.f32.mrb[0].mxu0
        %v1348 = vadd.f32 %v895, %v1347
        %v1349 = vpop.f32.mrb[0].mxu0
        %1350 = vmatprep.mubr.f32.mxu0 0.0
        %1351 = vmatmul.mubr.f32.gmra.mrb[0].mxu0 %v828
        %v1352 = vpop.f32.mrb[0].mxu0
        %v1353 = vadd.f32 %v895, %v1352
        %v1354 = vpop.f32.mrb[0].mxu0
        %1355 = vmatprep.mubr.f32.mxu0 0.0
        %1356 = vmatmul.mubr.f32.gmra.mrb[0].mxu0 %v829
        %v1357 = vpop.f32.mrb[0].mxu0
        %v1358 = vadd.f32 %v895, %v1357
        %v1359 = vpop.f32.mrb[0].mxu0
        %1360 = vmatprep.mubr.f32.mxu0 0.0
        %1361 = vmatmul.mubr.f32.gmra.mrb[0].mxu0 %v830
        %v1362 = vpop.f32.mrb[0].mxu0
        %v1363 = vadd.f32 %v895, %v1362
        %v1364 = vpop.f32.mrb[0].mxu0
        %1365 = vmatprep.mubr.f32.mxu0 0.0
        %1366 = vmatmul.mubr.f32.gmra.mrb[0].mxu0 %v831
        %v1367 = vpop.f32.mrb[0].mxu0
        %v1368 = vadd.f32 %v895, %v1367
        %v1369 = vpop.f32.mrb[0].mxu0
        %1370 = vmatprep.mubr.f32.mxu0 0.0
        %1371 = vmatmul.mubr.f32.gmra.mrb[0].mxu0 %v832
        %v1372 = vpop.f32.mrb[0].mxu0
        %v1373 = vadd.f32 %v895, %v1372
        %v1374 = vpop.f32.mrb[0].mxu0
        %1375 = vmatprep.mubr.f32.mxu0 0.0
        %1376 = vmatmul.mubr.f32.gmra.mrb[0].mxu0 %v833
        %v1377 = vpop.f32.mrb[0].mxu0
        %v1378 = vadd.f32 %v895, %v1377
        %v1379 = vpop.f32.mrb[0].mxu0
        %1380 = vdwg.mxu0
        %1381 = vst [vmem:[%s293] sm:$0xff] %v966
        %1382 = vst [vmem:[%s293 + $0x8] sm:$0xff] %v968
        %1383 = vst [vmem:[%s293 + $0x10] sm:$0xff] %v1223
        %1384 = vst [vmem:[%s293 + $0x18] sm:$0xff] %v972
        %1385 = vst [vmem:[%s293 + $0x20] sm:$0xff] %v974
        %1386 = vst [vmem:[%s293 + $0x28] sm:$0xff] %v1228
        %1387 = vst [vmem:[%s293 + $0x30] sm:$0xff] %v978
        %1388 = vst [vmem:[%s293 + $0x38] sm:$0xff] %v980
        %1389 = vst [vmem:[%s293 + $0x40] sm:$0xff] %v1233
        %1390 = vst [vmem:[%s293 + $0x48] sm:$0xff] %v984
        %1391 = vst [vmem:[%s293 + $0x50] sm:$0xff] %v986
        %1392 = vst [vmem:[%s293 + $0x58] sm:$0xff] %v1238
        %1393 = vst [vmem:[%s293 + $0x60] sm:$0xff] %v990
        %1394 = vst [vmem:[%s293 + $0x68] sm:$0xff] %v992
        %1395 = vst [vmem:[%s293 + $0x70] sm:$0xff] %v1243
        %1396 = vst [vmem:[%s293 + $0x78] sm:$0xff] %v996
        %1397 = vst [vmem:[%s293 + $0x80] sm:$0xff] %v998
        %1398 = vst [vmem:[%s293 + $0x88] sm:$0xff] %v1248
        %1399 = vst [vmem:[%s293 + $0x90] sm:$0xff] %v1002
        %1400 = vst [vmem:[%s293 + $0x98] sm:$0xff] %v1004
        %1401 = vst [vmem:[%s293 + $0xa0] sm:$0xff] %v1253
        %1402 = vst [vmem:[%s293 + $0xa8] sm:$0xff] %v1008
        %1403 = vst [vmem:[%s293 + $0xb0] sm:$0xff] %v1010
        %1404 = vst [vmem:[%s293 + $0xb8] sm:$0xff] %v1258
        %1405 = vst [vmem:[%s293 + $0xc0] sm:$0xff] %v1014
        %1406 = vst [vmem:[%s293 + $0xc8] sm:$0xff] %v1016
        %1407 = vst [vmem:[%s293 + $0xd0] sm:$0xff] %v1263
        %1408 = vst [vmem:[%s293 + $0xd8] sm:$0xff] %v1020
        %1409 = vst [vmem:[%s293 + $0xe0] sm:$0xff] %v1022
        %1410 = vst [vmem:[%s293 + $0xe8] sm:$0xff] %v1268
        %1411 = vst [vmem:[%s293 + $0xf0] sm:$0xff] %v1026
        %1412 = vst [vmem:[%s293 + $0xf8] sm:$0xff] %v1028
        %1413 = vst [vmem:[%s293 + $0x100] sm:$0xff] %v1273
        %1414 = vst [vmem:[%s293 + $0x108] sm:$0xff] %v1032
        %1415 = vst [vmem:[%s293 + $0x110] sm:$0xff] %v1034
        %1416 = vst [vmem:[%s293 + $0x118] sm:$0xff] %v1278
        %1417 = vst [vmem:[%s293 + $0x120] sm:$0xff] %v1038
        %1418 = vst [vmem:[%s293 + $0x128] sm:$0xff] %v1040
        %1419 = vst [vmem:[%s293 + $0x130] sm:$0xff] %v1283
        %1420 = vst [vmem:[%s293 + $0x138] sm:$0xff] %v1044
        %1421 = vst [vmem:[%s293 + $0x140] sm:$0xff] %v1046
        %1422 = vst [vmem:[%s293 + $0x148] sm:$0xff] %v1288
        %1423 = vst [vmem:[%s293 + $0x150] sm:$0xff] %v1050
        %1424 = vst [vmem:[%s293 + $0x158] sm:$0xff] %v1052
        %1425 = vst [vmem:[%s293 + $0x160] sm:$0xff] %v1293
        %1426 = vst [vmem:[%s293 + $0x168] sm:$0xff] %v1056
        %1427 = vst [vmem:[%s293 + $0x170] sm:$0xff] %v1058
        %1428 = vst [vmem:[%s293 + $0x178] sm:$0xff] %v1298
        %1429 = vst [vmem:[%s293 + $0x180] sm:$0xff] %v1062
        %1430 = vst [vmem:[%s293 + $0x188] sm:$0xff] %v1064
        %1431 = vst [vmem:[%s293 + $0x190] sm:$0xff] %v1303
        %1432 = vst [vmem:[%s293 + $0x198] sm:$0xff] %v1068
        %1433 = vst [vmem:[%s293 + $0x1a0] sm:$0xff] %v1070
        %1434 = vst [vmem:[%s293 + $0x1a8] sm:$0xff] %v1308
        %1435 = vst [vmem:[%s293 + $0x1b0] sm:$0xff] %v1074
        %1436 = vst [vmem:[%s293 + $0x1b8] sm:$0xff] %v1076
        %1437 = vst [vmem:[%s293 + $0x1c0] sm:$0xff] %v1313
        %1438 = vst [vmem:[%s293 + $0x1c8] sm:$0xff] %v1080
        %1439 = vst [vmem:[%s293 + $0x1d0] sm:$0xff] %v1082
        %1440 = vst [vmem:[%s293 + $0x1d8] sm:$0xff] %v1318
        %1441 = vst [vmem:[%s293 + $0x1e0] sm:$0xff] %v1086
        %1442 = vst [vmem:[%s293 + $0x1e8] sm:$0xff] %v1088
        %1443 = vst [vmem:[%s293 + $0x1f0] sm:$0xff] %v1323
        %1444 = vst [vmem:[%s293 + $0x1f8] sm:$0xff] %v1092
        %1445 = vst [vmem:[%s293 + $0x200] sm:$0xff] %v1094
        %1446 = vst [vmem:[%s293 + $0x208] sm:$0xff] %v1328
        %1447 = vst [vmem:[%s293 + $0x210] sm:$0xff] %v1098
        %1448 = vst [vmem:[%s293 + $0x218] sm:$0xff] %v1100
        %1449 = vst [vmem:[%s293 + $0x220] sm:$0xff] %v1333
        %1450 = vst [vmem:[%s293 + $0x228] sm:$0xff] %v1104
        %1451 = vst [vmem:[%s293 + $0x230] sm:$0xff] %v1106
        %1452 = vst [vmem:[%s293 + $0x238] sm:$0xff] %v1338
        %1453 = vst [vmem:[%s293 + $0x240] sm:$0xff] %v1110
        %1454 = vst [vmem:[%s293 + $0x248] sm:$0xff] %v1112
        %1455 = vst [vmem:[%s293 + $0x250] sm:$0xff] %v1343
        %1456 = vst [vmem:[%s293 + $0x258] sm:$0xff] %v1116
        %1457 = vst [vmem:[%s293 + $0x260] sm:$0xff] %v1118
        %1458 = vst [vmem:[%s293 + $0x268] sm:$0xff] %v1348
        %1459 = vst [vmem:[%s293 + $0x270] sm:$0xff] %v1122
        %1460 = vst [vmem:[%s293 + $0x278] sm:$0xff] %v1124
        %1461 = vst [vmem:[%s293 + $0x280] sm:$0xff] %v1353
        %1462 = vst [vmem:[%s293 + $0x288] sm:$0xff] %v1128
        %1463 = vst [vmem:[%s293 + $0x290] sm:$0xff] %v1130
        %1464 = vst [vmem:[%s293 + $0x298] sm:$0xff] %v1358
        %1465 = vst [vmem:[%s293 + $0x2a0] sm:$0xff] %v1134
        %1466 = vst [vmem:[%s293 + $0x2a8] sm:$0xff] %v1136
        %1467 = vst [vmem:[%s293 + $0x2b0] sm:$0xff] %v1363
        %1468 = vst [vmem:[%s293 + $0x2b8] sm:$0xff] %v1140
        %1469 = vst [vmem:[%s293 + $0x2c0] sm:$0xff] %v1142
        %1470 = vst [vmem:[%s293 + $0x2c8] sm:$0xff] %v1368
        %1471 = vst [vmem:[%s293 + $0x2d0] sm:$0xff] %v1146
        %1472 = vst [vmem:[%s293 + $0x2d8] sm:$0xff] %v1148
        %1473 = vst [vmem:[%s293 + $0x2e0] sm:$0xff] %v1373
        %1474 = vst [vmem:[%s293 + $0x2e8] sm:$0xff] %v1152
        %1475 = vst [vmem:[%s293 + $0x2f0] sm:$0xff] %v1154
        %1476 = vst [vmem:[%s293 + $0x2f8] sm:$0xff] %v1378
        %s1477 = sand.u32 %s165, 1
        %s1478 = scalar_lea.sflag [#allocation5], %s1477
        %s1479 = sand.u32 %s165, 1
        %s1480 = smul.addr %s1479, 768
        %s1481 = scalar_lea.vmem [#allocation8], %s1480
        // Predicated region
        $region53: #{tpu_custom_call.1} parent=39 // pred_check
          %p1482 = pneg %p175
        $region54: #{tpu_custom_call.1} parent=39 // pred_check_branch
          %1484 = sbr.rel (%p1482) target = $region56
        $region55: #{tpu_custom_call.1} parent=39 // pred_region
          %s1485 = smul.u32 32, %s27
          %s1486 = smul.u32 3, %s28
          %s1488 = ssub.s32 12288, 12288
          %1489 = vsyncadd %s1478, %s1488
          %s1490 = smul.addr %s1485, 3
          %s1491 = sadd.s32 %s1486, %s1490
          %s1492 = smul.addr %s1491, 128
          %s1493 = scalar_lea.hbm %s5, %s1492
          %s1494 = sshll.u32 %s1481, 4
          %s1495 = int_to_ptr.vmem [resolvable:$true] %s1494
          %1500 = dma.vmem_to_hbm [thread:$0]  %s1495, 12288, %s1493, %s1478, 384, 384, 24
        $region56: #{tpu_custom_call.1} parent=39 // pred_fallthru
          _
      $region40: #{tpu_custom_call.1} parent=5 // pred_fallthru
        _
      %p1501 = scmp.le.s32.totalorder 2, %s18
      // Predicated region
      $region57: #{tpu_custom_call.1} parent=5 // pred_check
        %p1502 = pneg %p1501
      $region58: #{tpu_custom_call.1} parent=5 // pred_check_branch
        %1504 = sbr.rel (%p1502) target = $region60
      $region59: #{tpu_custom_call.1} parent=5 // pred_region
        %s1505 = ssub.s32 %s18, 2
        // Predicated region
        $region61: #{tpu_custom_call.1} parent=59 // pred_check
          %p1506 = pneg %p181
        $region62: #{tpu_custom_call.1} parent=59 // pred_check_branch
          %1508 = sbr.rel (%p1506) target = $region64
        $region63: #{tpu_custom_call.1} parent=59 // pred_region
          %s1509 = sand.u32 %s166, 1
          %s1510 = scalar_lea.sflag [#allocation5], %s1509
          %s1511 = sand.u32 %s166, 1
          %s1512 = smul.addr %s1511, 768
          %s1513 = scalar_lea.vmem [#allocation8], %s1512
          %1514 = dma.done %s1510, 12288
        $region64: #{tpu_custom_call.1} parent=59 // pred_fallthru
          _
      $region60: #{tpu_custom_call.1} parent=5 // pred_fallthru
        _
    $region6: #{tpu_custom_call.1} parent=1 // loop_footer
      %s22 = sadd.s32 1, %s18
    $region7: #{tpu_custom_call.1} parent=1 // loop_footer_branch
      %17 = sbr.rel target = $region3
    $region8: #{tpu_custom_call.1} parent=1 // loop_exit
      _
    %1515 = vsyncpa [#allocation4], 1
    %s1516 = scalar_lea.sflag [#allocation4], 1
    %1517 = vsyncpa %s1516, 1
    %1518 = vsyncpa [#allocation7], 1
    %1519 = vsyncpa [#allocation5], 1
    %s1520 = scalar_lea.sflag [#allocation5], 1
    %1521 = vsyncpa %s1520, 1

</llo_original>
